<compile_context>
chip_gen: v6e
topology: v6e:2x2x1
jax: 0.10.0
libtpu: 0.0.40
codegen_flags: <defaults>
</compile_context>

<pallas_src>
import functools
import math

import jax
import jax.numpy as jnp
import numpy as np
from jax import lax
from jax.experimental import pallas as pl
from jax.experimental.pallas import tpu as pltpu

# ----------------------------- model config ---------------------------------
INPUT_PARAMS = 16   # input feature dim
D_MODEL = 32
NHEAD = 4
HEAD_DIM = D_MODEL // NHEAD
NUM_LAYERS = 2
DIM_FF = 64
SEQ = 8             # == batch size in the PyTorch forward (seq dim after unsqueeze)
LN_EPS = 1e-5
LANES = 128

_VMEM = pl.BlockSpec(memory_space=pltpu.MemorySpace.VMEM)


# ------------------------ static weight-slab layout --------------------------
def _param_layout():
    """name -> (row_offset, (rows, cols)) inside the single (SLAB_ROWS, 128) slab.
    Each tensor starts on an 8-row (sublane) boundary so in-kernel static slices
    stay tile-aligned."""
    entries = [("emb_w", (INPUT_PARAMS, D_MODEL)), ("emb_b", (1, D_MODEL))]
    for l in range(NUM_LAYERS):
        entries += [
            (f"l{l}_wqkv", (D_MODEL, 3 * D_MODEL)),   # in_w.T  : cols = [q | k | v]
            (f"l{l}_bqkv", (1, 3 * D_MODEL)),
            (f"l{l}_wo",   (D_MODEL, D_MODEL)),       # out_w.T : plain x @ W layout
            (f"l{l}_bo",   (1, D_MODEL)),
            (f"l{l}_ln1w", (1, D_MODEL)),
            (f"l{l}_ln1b", (1, D_MODEL)),
            (f"l{l}_w1",   (D_MODEL, DIM_FF)),
            (f"l{l}_b1",   (1, DIM_FF)),
            (f"l{l}_w2",   (DIM_FF, D_MODEL)),
            (f"l{l}_b2",   (1, D_MODEL)),
            (f"l{l}_ln2w", (1, D_MODEL)),
            (f"l{l}_ln2b", (1, D_MODEL)),
        ]
    entries += [("head_w", (1, D_MODEL)), ("head_b", (1, 1))]
    layout, off = {}, 0
    for name, shape in entries:
        layout[name] = (off, shape)
        off += -(-shape[0] // 8) * 8           # round rows up to sublane multiple
    total_rows = -(-off // 8) * 8
    return layout, total_rows


LAYOUT, SLAB_ROWS = _param_layout()


def pack_params(params):
    """One-time host-side repack of PyTorch-layout weights into a single
    lane-dense (SLAB_ROWS, 128) f32 slab in x @ W layout -> ONE DMA at launch."""
    slab = np.zeros((SLAB_ROWS, LANES), np.float32)

    def put(name, arr):
        arr = np.asarray(arr, np.float32)
        off, shape = LAYOUT[name]
        assert arr.shape == shape, (name, arr.shape, shape)
        slab[off:off + shape[0], :shape[1]] = arr

    put("emb_w", np.asarray(params["emb_w"]).T)
    put("emb_b", params["emb_b"])
    for l, lp in enumerate(params["layers"]):
        put(f"l{l}_wqkv", np.asarray(lp["in_w"]).T)     # (D, 3D)
        put(f"l{l}_bqkv", lp["in_b"])
        put(f"l{l}_wo",   np.asarray(lp["out_w"]).T)    # (D, D)
        put(f"l{l}_bo",   lp["out_b"])
        put(f"l{l}_ln1w", lp["ln1_w"])
        put(f"l{l}_ln1b", lp["ln1_b"])
        put(f"l{l}_w1",   np.asarray(lp["lin1_w"]).T)   # (D, FF)
        put(f"l{l}_b1",   lp["lin1_b"])
        put(f"l{l}_w2",   np.asarray(lp["lin2_w"]).T)   # (FF, D)
        put(f"l{l}_b2",   lp["lin2_b"])
        put(f"l{l}_ln2w", lp["ln2_w"])
        put(f"l{l}_ln2b", lp["ln2_b"])
    put("head_w", params["head_w"])
    put("head_b", params["head_b"])
    return jnp.asarray(slab)


# ------------------------------- kernel --------------------------------------
def _layer_norm(y, gamma, beta, eps):
    mean = jnp.mean(y, axis=-1, keepdims=True)
    var = jnp.mean((y - mean) ** 2, axis=-1, keepdims=True)
    return (y - mean) * lax.rsqrt(var + eps) * gamma + beta


def _fused_forward_kernel(x_ref, slab_ref, o_ref, ctx_ref, *, nhead, num_layers, eps):
    def get(name):                          # zero-cost static slice of the slab
        off, (r, c) = LAYOUT[name]
        return slab_ref[off:off + r, :c]

    x = x_ref[...]
    # embedding: (S, I) @ (I, D) + (1, D)
    h = jnp.dot(x, get("emb_w"), preferred_element_type=jnp.float32) + get("emb_b")

    hd = D_MODEL // nhead
    scale = 1.0 / math.sqrt(hd)

    for l in range(num_layers):
        # --- QKV: ONE lane-dense (S, D) @ (D, 3D) matmul -------------------------
        qkv = (jnp.dot(h, get(f"l{l}_wqkv"), preferred_element_type=jnp.float32)
               + get(f"l{l}_bqkv"))                                   # (S, 3D)

        # --- per-head attention, unrolled over static lane slices ----------------
        for hh in range(nhead):
            q_h = qkv[:, hh * hd:(hh + 1) * hd]                                   # (S, hd)
            k_h = qkv[:, D_MODEL + hh * hd:D_MODEL + (hh + 1) * hd]               # (S, hd)
            v_h = qkv[:, 2 * D_MODEL + hh * hd:2 * D_MODEL + (hh + 1) * hd]       # (S, hd)
            s = lax.dot_general(q_h, k_h, (((1,), (1,)), ((), ())),
                                preferred_element_type=jnp.float32) * scale       # (S, S)
            s = s - jnp.max(s, axis=-1, keepdims=True)
            p = jnp.exp(s)
            p = p * pl.reciprocal(jnp.sum(p, axis=-1, keepdims=True), approx=True)
            # write this head's context into its static lane slice of the scratch
            ctx_ref[:, hh * hd:(hh + 1) * hd] = jnp.dot(
                p, v_h, preferred_element_type=jnp.float32)

        # --- output projection: ONE (S, D) @ (D, D) matmul ------------------------
        attn = (jnp.dot(ctx_ref[...], get(f"l{l}_wo"),
                        preferred_element_type=jnp.float32) + get(f"l{l}_bo"))

        # --- residual + LayerNorm 1 (post-norm, PyTorch default) ------------------
        y = _layer_norm(h + attn, get(f"l{l}_ln1w"), get(f"l{l}_ln1b"), eps)

        # --- feed forward (relu) ---------------------------------------------------
        ff = (jnp.dot(y, get(f"l{l}_w1"), preferred_element_type=jnp.float32)
              + get(f"l{l}_b1"))
        ff = jnp.maximum(ff, 0.0)
        ff = (jnp.dot(ff, get(f"l{l}_w2"), preferred_element_type=jnp.float32)
              + get(f"l{l}_b2"))

        # --- residual + LayerNorm 2 -------------------------------------------------
        h = _layer_norm(y + ff, get(f"l{l}_ln2w"), get(f"l{l}_ln2b"), eps)

    # head projection: (1, D) x (S, D) -> (1, S)  (lane-dense output slab)
    out = lax.dot_general(get("head_w"), h, (((1,), (1,)), ((), ())),
                          preferred_element_type=jnp.float32) + get("head_b")
    o_ref[...] = out.astype(o_ref.dtype)


def transformer_forward(x, weight_slab, *, nhead=NHEAD, num_layers=NUM_LAYERS,
                        eps=LN_EPS):
    # x: (batch, input_params). batch plays the role of the sequence dim
    # (PyTorch: unsqueeze(1) -> (seq=batch, batch=1, d_model)).
    S = x.shape[0]
    kern = functools.partial(_fused_forward_kernel, nhead=nhead,
                             num_layers=num_layers, eps=eps)
    out = pl.pallas_call(
        kern,
        out_shape=jax.ShapeDtypeStruct((1, S), jnp.float32),
        in_specs=[_VMEM, _VMEM],
        out_specs=_VMEM,
        scratch_shapes=[pltpu.VMEM((S, D_MODEL), jnp.float32)],   # ctx_concat
    )(x, weight_slab)
    return out.T                                                    # (S, 1)


# ---------------------------- parameter init ---------------------------------
def init_params(key):
    def nrm(key, shape, scale=0.1):
        return (scale * jax.random.normal(key, shape)).astype(jnp.float32)

    keys = jax.random.split(key, 4 + NUM_LAYERS)
    params = {
        "emb_w": nrm(keys[0], (D_MODEL, INPUT_PARAMS)),
        "emb_b": nrm(keys[1], (1, D_MODEL)),
        "head_w": nrm(keys[2], (1, D_MODEL)),
        "head_b": nrm(keys[3], (1, 1)),
        "layers": [],
    }
    for l in range(NUM_LAYERS):
        lk = jax.random.split(keys[4 + l], 12)
        params["layers"].append({
            "in_w":  nrm(lk[0], (3 * D_MODEL, D_MODEL)),
            "in_b":  nrm(lk[1], (1, 3 * D_MODEL)),
            "out_w": nrm(lk[2], (D_MODEL, D_MODEL)),
            "out_b": nrm(lk[3], (1, D_MODEL)),
            "ln1_w": jnp.ones((1, D_MODEL), jnp.float32) + nrm(lk[4], (1, D_MODEL), 0.05),
            "ln1_b": nrm(lk[5], (1, D_MODEL), 0.05),
            "lin1_w": nrm(lk[6], (DIM_FF, D_MODEL)),
            "lin1_b": nrm(lk[7], (1, DIM_FF)),
            "lin2_w": nrm(lk[8], (D_MODEL, DIM_FF)),
            "lin2_b": nrm(lk[9], (1, D_MODEL)),
            "ln2_w": jnp.ones((1, D_MODEL), jnp.float32) + nrm(lk[10], (1, D_MODEL), 0.05),
            "ln2_b": nrm(lk[11], (1, D_MODEL), 0.05),
        })
    return params


# -------------------------- pure-JAX reference -------------------------------
def _ref_forward(x, params):
    def lin(x, w, b):
        return x @ w.T + b

    def ln(y, g, b):
        m = jnp.mean(y, -1, keepdims=True)
        v = jnp.mean((y - m) ** 2, -1, keepdims=True)
        return (y - m) * lax.rsqrt(v + LN_EPS) * g + b

    h = lin(x, params["emb_w"], params["emb_b"])
    hd = D_MODEL // NHEAD
    for lp in params["layers"]:
        qkv = lin(h, lp["in_w"], lp["in_b"])
        q, k, v = qkv[:, :D_MODEL], qkv[:, D_MODEL:2 * D_MODEL], qkv[:, 2 * D_MODEL:]
        outs = []
        for i in range(NHEAD):
            qh, kh, vh = (t[:, i * hd:(i + 1) * hd] for t in (q, k, v))
            s = qh @ kh.T / math.sqrt(hd)
            p = jax.nn.softmax(s, axis=-1)
            outs.append(p @ vh)
        attn = lin(jnp.concatenate(outs, -1), lp["out_w"], lp["out_b"])
        y = ln(h + attn, lp["ln1_w"], lp["ln1_b"])
        f = lin(jnp.maximum(lin(y, lp["lin1_w"], lp["lin1_b"]), 0.0),
                lp["lin2_w"], lp["lin2_b"])
        h = ln(y + f, lp["ln2_w"], lp["ln2_b"])
    return lin(h, params["head_w"], params["head_b"])


# --------------------------------- main ---------------------------------------
if __name__ == "__main__":
    key = jax.random.PRNGKey(0)
    pkey, xkey = jax.random.split(key)
    params = init_params(pkey)
    weight_slab = pack_params(params)        # one-time host-side repack -> single slab
    x = jax.random.normal(xkey, (SEQ, INPUT_PARAMS), dtype=jnp.float32)

    out = transformer_forward(x, weight_slab)
    out = jax.block_until_ready(out)
    assert out.shape == (SEQ, 1), out.shape

    ref = jax.block_until_ready(_ref_forward(x, params))
    np.testing.assert_allclose(np.asarray(out), np.asarray(ref), rtol=2e-2, atol=5e-3)

    print("KERNEL_OK")
</pallas_src>

<mosaic_0001>
module attributes {stable_mosaic.version = 11 : i64} {
  func.func @_fused_forward_kernel(%arg0: memref<8x16xf32, #tpu.memory_space<vmem>>, %arg1: memref<488x128xf32, #tpu.memory_space<vmem>>, %arg2: memref<1x8xf32, #tpu.memory_space<vmem>>, %arg3: memref<8x32xf32, #tpu.memory_space<vmem>>) attributes {dimension_semantics = [], scalar_prefetch = 0 : i64, scratch_operands = 1 : i64, tpu.core_type = #tpu.core_type<tc>} {
    %c0 = arith.constant 0 : index
    %c0_0 = arith.constant 0 : index
    %0 = vector.load %arg0[%c0, %c0_0] : memref<8x16xf32, #tpu.memory_space<vmem>>, vector<8x16xf32>
    %c0_1 = arith.constant 0 : index
    %c0_2 = arith.constant 0 : index
    %1 = vector.load %arg1[%c0_1, %c0_2] : memref<488x128xf32, #tpu.memory_space<vmem>>, vector<16x32xf32>
    %cst = arith.constant dense<0.000000e+00> : vector<8x32xf32>
    %2 = tpu.matmul %0, %1, %cst {dimension_numbers = #tpu.dot_dimension_numbers<[1], [0], [0], [1], [0, 0, 1, 1], [], []>} : vector<8x16xf32>, vector<16x32xf32>, vector<8x32xf32> -> vector<8x32xf32>
    %c16 = arith.constant 16 : index
    %c0_3 = arith.constant 0 : index
    %3 = vector.load %arg1[%c16, %c0_3] : memref<488x128xf32, #tpu.memory_space<vmem>>, vector<1x32xf32>
    %4 = vector.broadcast %3 : vector<1x32xf32> to vector<8x32xf32>
    %5 = arith.addf %2, %4 : vector<8x32xf32>
    %c24 = arith.constant 24 : index
    %c0_4 = arith.constant 0 : index
    %6 = vector.load %arg1[%c24, %c0_4] : memref<488x128xf32, #tpu.memory_space<vmem>>, vector<32x96xf32>
    %cst_5 = arith.constant dense<0.000000e+00> : vector<8x96xf32>
    %7 = tpu.matmul %5, %6, %cst_5 {dimension_numbers = #tpu.dot_dimension_numbers<[1], [0], [0], [1], [0, 0, 1, 1], [], []>} : vector<8x32xf32>, vector<32x96xf32>, vector<8x96xf32> -> vector<8x96xf32>
    %c56 = arith.constant 56 : index
    %c0_6 = arith.constant 0 : index
    %8 = vector.load %arg1[%c56, %c0_6] : memref<488x128xf32, #tpu.memory_space<vmem>>, vector<1x96xf32>
    %9 = vector.broadcast %8 : vector<1x96xf32> to vector<8x96xf32>
    %10 = arith.addf %7, %9 : vector<8x96xf32>
    %11 = vector.extract_strided_slice %10 {offsets = [0, 0], sizes = [8, 8], strides = [1, 1]} : vector<8x96xf32> to vector<8x8xf32>
    %12 = vector.extract_strided_slice %10 {offsets = [0, 32], sizes = [8, 8], strides = [1, 1]} : vector<8x96xf32> to vector<8x8xf32>
    %13 = vector.extract_strided_slice %10 {offsets = [0, 64], sizes = [8, 8], strides = [1, 1]} : vector<8x96xf32> to vector<8x8xf32>
    %cst_7 = arith.constant dense<0.000000e+00> : vector<8x8xf32>
    %14 = tpu.matmul %11, %12, %cst_7 {dimension_numbers = #tpu.dot_dimension_numbers<[1], [1], [0], [0], [0, 0, 1, 0], [], []>} : vector<8x8xf32>, vector<8x8xf32>, vector<8x8xf32> -> vector<8x8xf32>
    %cst_8 = arith.constant 0.353553385 : f32
    %15 = vector.broadcast %cst_8 : f32 to vector<8x8xf32>
    %16 = arith.mulf %14, %15 : vector<8x8xf32>
    %cst_9 = arith.constant dense<0xFF800000> : vector<8xf32>
    %17 = vector.multi_reduction <maximumf>, %16, %cst_9 [1] : vector<8x8xf32> to vector<8xf32>
    %18 = vector.shape_cast %17 : vector<8xf32> to vector<8x1xf32>
    %19 = vector.broadcast %18 : vector<8x1xf32> to vector<8x8xf32>
    %20 = arith.subf %16, %19 : vector<8x8xf32>
    %21 = math.exp %20 : vector<8x8xf32>
    %cst_10 = arith.constant dense<0.000000e+00> : vector<8xf32>
    %22 = vector.multi_reduction <add>, %21, %cst_10 [1] : vector<8x8xf32> to vector<8xf32>
    %23 = vector.shape_cast %22 : vector<8xf32> to vector<8x1xf32>
    %24 = tpu.reciprocal %23 {approx = true} : vector<8x1xf32> -> vector<8x1xf32>
    %25 = vector.broadcast %24 : vector<8x1xf32> to vector<8x8xf32>
    %26 = arith.mulf %21, %25 : vector<8x8xf32>
    %cst_11 = arith.constant dense<0.000000e+00> : vector<8x8xf32>
    %27 = tpu.matmul %26, %13, %cst_11 {dimension_numbers = #tpu.dot_dimension_numbers<[1], [0], [0], [1], [0, 0, 1, 1], [], []>} : vector<8x8xf32>, vector<8x8xf32>, vector<8x8xf32> -> vector<8x8xf32>
    %c0_12 = arith.constant 0 : index
    %c0_13 = arith.constant 0 : index
    %28 = vector.load %arg3[%c0_12, %c0_13] : memref<8x32xf32, #tpu.memory_space<vmem>>, vector<8x8xf32>
    tpu.vector_store %arg3[%c0_12, %c0_13], %27 {strides = array<i32>} : memref<8x32xf32, #tpu.memory_space<vmem>>, vector<8x8xf32>,
    %29 = vector.extract_strided_slice %10 {offsets = [0, 8], sizes = [8, 8], strides = [1, 1]} : vector<8x96xf32> to vector<8x8xf32>
    %30 = vector.extract_strided_slice %10 {offsets = [0, 40], sizes = [8, 8], strides = [1, 1]} : vector<8x96xf32> to vector<8x8xf32>
    %31 = vector.extract_strided_slice %10 {offsets = [0, 72], sizes = [8, 8], strides = [1, 1]} : vector<8x96xf32> to vector<8x8xf32>
    %cst_14 = arith.constant dense<0.000000e+00> : vector<8x8xf32>
    %32 = tpu.matmul %29, %30, %cst_14 {dimension_numbers = #tpu.dot_dimension_numbers<[1], [1], [0], [0], [0, 0, 1, 0], [], []>} : vector<8x8xf32>, vector<8x8xf32>, vector<8x8xf32> -> vector<8x8xf32>
    %cst_15 = arith.constant 0.353553385 : f32
    %33 = vector.broadcast %cst_15 : f32 to vector<8x8xf32>
    %34 = arith.mulf %32, %33 : vector<8x8xf32>
    %cst_16 = arith.constant dense<0xFF800000> : vector<8xf32>
    %35 = vector.multi_reduction <maximumf>, %34, %cst_16 [1] : vector<8x8xf32> to vector<8xf32>
    %36 = vector.shape_cast %35 : vector<8xf32> to vector<8x1xf32>
    %37 = vector.broadcast %36 : vector<8x1xf32> to vector<8x8xf32>
    %38 = arith.subf %34, %37 : vector<8x8xf32>
    %39 = math.exp %38 : vector<8x8xf32>
    %cst_17 = arith.constant dense<0.000000e+00> : vector<8xf32>
    %40 = vector.multi_reduction <add>, %39, %cst_17 [1] : vector<8x8xf32> to vector<8xf32>
    %41 = vector.shape_cast %40 : vector<8xf32> to vector<8x1xf32>
    %42 = tpu.reciprocal %41 {approx = true} : vector<8x1xf32> -> vector<8x1xf32>
    %43 = vector.broadcast %42 : vector<8x1xf32> to vector<8x8xf32>
    %44 = arith.mulf %39, %43 : vector<8x8xf32>
    %cst_18 = arith.constant dense<0.000000e+00> : vector<8x8xf32>
    %45 = tpu.matmul %44, %31, %cst_18 {dimension_numbers = #tpu.dot_dimension_numbers<[1], [0], [0], [1], [0, 0, 1, 1], [], []>} : vector<8x8xf32>, vector<8x8xf32>, vector<8x8xf32> -> vector<8x8xf32>
    %c0_19 = arith.constant 0 : index
    %c8 = arith.constant 8 : index
    %46 = vector.load %arg3[%c0_19, %c8] : memref<8x32xf32, #tpu.memory_space<vmem>>, vector<8x8xf32>
    tpu.vector_store %arg3[%c0_19, %c8], %45 {strides = array<i32>} : memref<8x32xf32, #tpu.memory_space<vmem>>, vector<8x8xf32>,
    %47 = vector.extract_strided_slice %10 {offsets = [0, 16], sizes = [8, 8], strides = [1, 1]} : vector<8x96xf32> to vector<8x8xf32>
    %48 = vector.extract_strided_slice %10 {offsets = [0, 48], sizes = [8, 8], strides = [1, 1]} : vector<8x96xf32> to vector<8x8xf32>
    %49 = vector.extract_strided_slice %10 {offsets = [0, 80], sizes = [8, 8], strides = [1, 1]} : vector<8x96xf32> to vector<8x8xf32>
    %cst_20 = arith.constant dense<0.000000e+00> : vector<8x8xf32>
    %50 = tpu.matmul %47, %48, %cst_20 {dimension_numbers = #tpu.dot_dimension_numbers<[1], [1], [0], [0], [0, 0, 1, 0], [], []>} : vector<8x8xf32>, vector<8x8xf32>, vector<8x8xf32> -> vector<8x8xf32>
    %cst_21 = arith.constant 0.353553385 : f32
    %51 = vector.broadcast %cst_21 : f32 to vector<8x8xf32>
    %52 = arith.mulf %50, %51 : vector<8x8xf32>
    %cst_22 = arith.constant dense<0xFF800000> : vector<8xf32>
    %53 = vector.multi_reduction <maximumf>, %52, %cst_22 [1] : vector<8x8xf32> to vector<8xf32>
    %54 = vector.shape_cast %53 : vector<8xf32> to vector<8x1xf32>
    %55 = vector.broadcast %54 : vector<8x1xf32> to vector<8x8xf32>
    %56 = arith.subf %52, %55 : vector<8x8xf32>
    %57 = math.exp %56 : vector<8x8xf32>
    %cst_23 = arith.constant dense<0.000000e+00> : vector<8xf32>
    %58 = vector.multi_reduction <add>, %57, %cst_23 [1] : vector<8x8xf32> to vector<8xf32>
    %59 = vector.shape_cast %58 : vector<8xf32> to vector<8x1xf32>
    %60 = tpu.reciprocal %59 {approx = true} : vector<8x1xf32> -> vector<8x1xf32>
    %61 = vector.broadcast %60 : vector<8x1xf32> to vector<8x8xf32>
    %62 = arith.mulf %57, %61 : vector<8x8xf32>
    %cst_24 = arith.constant dense<0.000000e+00> : vector<8x8xf32>
    %63 = tpu.matmul %62, %49, %cst_24 {dimension_numbers = #tpu.dot_dimension_numbers<[1], [0], [0], [1], [0, 0, 1, 1], [], []>} : vector<8x8xf32>, vector<8x8xf32>, vector<8x8xf32> -> vector<8x8xf32>
    %c0_25 = arith.constant 0 : index
    %c16_26 = arith.constant 16 : index
    %64 = vector.load %arg3[%c0_25, %c16_26] : memref<8x32xf32, #tpu.memory_space<vmem>>, vector<8x8xf32>
    tpu.vector_store %arg3[%c0_25, %c16_26], %63 {strides = array<i32>} : memref<8x32xf32, #tpu.memory_space<vmem>>, vector<8x8xf32>,
    %65 = vector.extract_strided_slice %10 {offsets = [0, 24], sizes = [8, 8], strides = [1, 1]} : vector<8x96xf32> to vector<8x8xf32>
    %66 = vector.extract_strided_slice %10 {offsets = [0, 56], sizes = [8, 8], strides = [1, 1]} : vector<8x96xf32> to vector<8x8xf32>
    %67 = vector.extract_strided_slice %10 {offsets = [0, 88], sizes = [8, 8], strides = [1, 1]} : vector<8x96xf32> to vector<8x8xf32>
    %cst_27 = arith.constant dense<0.000000e+00> : vector<8x8xf32>
    %68 = tpu.matmul %65, %66, %cst_27 {dimension_numbers = #tpu.dot_dimension_numbers<[1], [1], [0], [0], [0, 0, 1, 0], [], []>} : vector<8x8xf32>, vector<8x8xf32>, vector<8x8xf32> -> vector<8x8xf32>
    %cst_28 = arith.constant 0.353553385 : f32
    %69 = vector.broadcast %cst_28 : f32 to vector<8x8xf32>
    %70 = arith.mulf %68, %69 : vector<8x8xf32>
    %cst_29 = arith.constant dense<0xFF800000> : vector<8xf32>
    %71 = vector.multi_reduction <maximumf>, %70, %cst_29 [1] : vector<8x8xf32> to vector<8xf32>
    %72 = vector.shape_cast %71 : vector<8xf32> to vector<8x1xf32>
    %73 = vector.broadcast %72 : vector<8x1xf32> to vector<8x8xf32>
    %74 = arith.subf %70, %73 : vector<8x8xf32>
    %75 = math.exp %74 : vector<8x8xf32>
    %cst_30 = arith.constant dense<0.000000e+00> : vector<8xf32>
    %76 = vector.multi_reduction <add>, %75, %cst_30 [1] : vector<8x8xf32> to vector<8xf32>
    %77 = vector.shape_cast %76 : vector<8xf32> to vector<8x1xf32>
    %78 = tpu.reciprocal %77 {approx = true} : vector<8x1xf32> -> vector<8x1xf32>
    %79 = vector.broadcast %78 : vector<8x1xf32> to vector<8x8xf32>
    %80 = arith.mulf %75, %79 : vector<8x8xf32>
    %cst_31 = arith.constant dense<0.000000e+00> : vector<8x8xf32>
    %81 = tpu.matmul %80, %67, %cst_31 {dimension_numbers = #tpu.dot_dimension_numbers<[1], [0], [0], [1], [0, 0, 1, 1], [], []>} : vector<8x8xf32>, vector<8x8xf32>, vector<8x8xf32> -> vector<8x8xf32>
    %c0_32 = arith.constant 0 : index
    %c24_33 = arith.constant 24 : index
    %82 = vector.load %arg3[%c0_32, %c24_33] : memref<8x32xf32, #tpu.memory_space<vmem>>, vector<8x8xf32>
    tpu.vector_store %arg3[%c0_32, %c24_33], %81 {strides = array<i32>} : memref<8x32xf32, #tpu.memory_space<vmem>>, vector<8x8xf32>,
    %c0_34 = arith.constant 0 : index
    %c0_35 = arith.constant 0 : index
    %83 = vector.load %arg3[%c0_34, %c0_35] : memref<8x32xf32, #tpu.memory_space<vmem>>, vector<8x32xf32>
    %c64 = arith.constant 64 : index
    %c0_36 = arith.constant 0 : index
    %84 = vector.load %arg1[%c64, %c0_36] : memref<488x128xf32, #tpu.memory_space<vmem>>, vector<32x32xf32>
    %cst_37 = arith.constant dense<0.000000e+00> : vector<8x32xf32>
    %85 = tpu.matmul %83, %84, %cst_37 {dimension_numbers = #tpu.dot_dimension_numbers<[1], [0], [0], [1], [0, 0, 1, 1], [], []>} : vector<8x32xf32>, vector<32x32xf32>, vector<8x32xf32> -> vector<8x32xf32>
    %c96 = arith.constant 96 : index
    %c0_38 = arith.constant 0 : index
    %86 = vector.load %arg1[%c96, %c0_38] : memref<488x128xf32, #tpu.memory_space<vmem>>, vector<1x32xf32>
    %87 = vector.broadcast %86 : vector<1x32xf32> to vector<8x32xf32>
    %88 = arith.addf %85, %87 : vector<8x32xf32>
    %89 = arith.addf %5, %88 : vector<8x32xf32>
    %c104 = arith.constant 104 : index
    %c0_39 = arith.constant 0 : index
    %90 = vector.load %arg1[%c104, %c0_39] : memref<488x128xf32, #tpu.memory_space<vmem>>, vector<1x32xf32>
    %c112 = arith.constant 112 : index
    %c0_40 = arith.constant 0 : index
    %91 = vector.load %arg1[%c112, %c0_40] : memref<488x128xf32, #tpu.memory_space<vmem>>, vector<1x32xf32>
    %cst_41 = arith.constant dense<0.000000e+00> : vector<8xf32>
    %92 = vector.multi_reduction <add>, %89, %cst_41 [1] : vector<8x32xf32> to vector<8xf32>
    %93 = vector.shape_cast %92 : vector<8xf32> to vector<8x1xf32>
    %cst_42 = arith.constant 3.200000e+01 : f32
    %94 = vector.broadcast %cst_42 : f32 to vector<8x1xf32>
    %95 = arith.divf %93, %94 : vector<8x1xf32>
    %96 = vector.broadcast %95 : vector<8x1xf32> to vector<8x32xf32>
    %97 = arith.subf %89, %96 : vector<8x32xf32>
    %98 = arith.mulf %97, %97 : vector<8x32xf32>
    %cst_43 = arith.constant dense<0.000000e+00> : vector<8xf32>
    %99 = vector.multi_reduction <add>, %98, %cst_43 [1] : vector<8x32xf32> to vector<8xf32>
    %100 = vector.shape_cast %99 : vector<8xf32> to vector<8x1xf32>
    %cst_44 = arith.constant 3.200000e+01 : f32
    %101 = vector.broadcast %cst_44 : f32 to vector<8x1xf32>
    %102 = arith.divf %100, %101 : vector<8x1xf32>
    %103 = vector.broadcast %95 : vector<8x1xf32> to vector<8x32xf32>
    %104 = arith.subf %89, %103 : vector<8x32xf32>
    %cst_45 = arith.constant 9.99999974E-6 : f32
    %105 = vector.broadcast %cst_45 : f32 to vector<8x1xf32>
    %106 = arith.addf %102, %105 : vector<8x1xf32>
    %107 = math.rsqrt %106 : vector<8x1xf32>
    %108 = vector.broadcast %107 : vector<8x1xf32> to vector<8x32xf32>
    %109 = arith.mulf %104, %108 : vector<8x32xf32>
    %110 = vector.broadcast %90 : vector<1x32xf32> to vector<8x32xf32>
    %111 = arith.mulf %109, %110 : vector<8x32xf32>
    %112 = vector.broadcast %91 : vector<1x32xf32> to vector<8x32xf32>
    %113 = arith.addf %111, %112 : vector<8x32xf32>
    %c120 = arith.constant 120 : index
    %c0_46 = arith.constant 0 : index
    %114 = vector.load %arg1[%c120, %c0_46] : memref<488x128xf32, #tpu.memory_space<vmem>>, vector<32x64xf32>
    %cst_47 = arith.constant dense<0.000000e+00> : vector<8x64xf32>
    %115 = tpu.matmul %113, %114, %cst_47 {dimension_numbers = #tpu.dot_dimension_numbers<[1], [0], [0], [1], [0, 0, 1, 1], [], []>} : vector<8x32xf32>, vector<32x64xf32>, vector<8x64xf32> -> vector<8x64xf32>
    %c152 = arith.constant 152 : index
    %c0_48 = arith.constant 0 : index
    %116 = vector.load %arg1[%c152, %c0_48] : memref<488x128xf32, #tpu.memory_space<vmem>>, vector<1x64xf32>
    %117 = vector.broadcast %116 : vector<1x64xf32> to vector<8x64xf32>
    %118 = arith.addf %115, %117 : vector<8x64xf32>
    %cst_49 = arith.constant 0.000000e+00 : f32
    %119 = vector.broadcast %cst_49 : f32 to vector<8x64xf32>
    %120 = arith.maximumf %118, %119 : vector<8x64xf32>
    %c160 = arith.constant 160 : index
    %c0_50 = arith.constant 0 : index
    %121 = vector.load %arg1[%c160, %c0_50] : memref<488x128xf32, #tpu.memory_space<vmem>>, vector<64x32xf32>
    %cst_51 = arith.constant dense<0.000000e+00> : vector<8x32xf32>
    %122 = tpu.matmul %120, %121, %cst_51 {dimension_numbers = #tpu.dot_dimension_numbers<[1], [0], [0], [1], [0, 0, 1, 1], [], []>} : vector<8x64xf32>, vector<64x32xf32>, vector<8x32xf32> -> vector<8x32xf32>
    %c224 = arith.constant 224 : index
    %c0_52 = arith.constant 0 : index
    %123 = vector.load %arg1[%c224, %c0_52] : memref<488x128xf32, #tpu.memory_space<vmem>>, vector<1x32xf32>
    %124 = vector.broadcast %123 : vector<1x32xf32> to vector<8x32xf32>
    %125 = arith.addf %122, %124 : vector<8x32xf32>
    %126 = arith.addf %113, %125 : vector<8x32xf32>
    %c232 = arith.constant 232 : index
    %c0_53 = arith.constant 0 : index
    %127 = vector.load %arg1[%c232, %c0_53] : memref<488x128xf32, #tpu.memory_space<vmem>>, vector<1x32xf32>
    %c240 = arith.constant 240 : index
    %c0_54 = arith.constant 0 : index
    %128 = vector.load %arg1[%c240, %c0_54] : memref<488x128xf32, #tpu.memory_space<vmem>>, vector<1x32xf32>
    %cst_55 = arith.constant dense<0.000000e+00> : vector<8xf32>
    %129 = vector.multi_reduction <add>, %126, %cst_55 [1] : vector<8x32xf32> to vector<8xf32>
    %130 = vector.shape_cast %129 : vector<8xf32> to vector<8x1xf32>
    %cst_56 = arith.constant 3.200000e+01 : f32
    %131 = vector.broadcast %cst_56 : f32 to vector<8x1xf32>
    %132 = arith.divf %130, %131 : vector<8x1xf32>
    %133 = vector.broadcast %132 : vector<8x1xf32> to vector<8x32xf32>
    %134 = arith.subf %126, %133 : vector<8x32xf32>
    %135 = arith.mulf %134, %134 : vector<8x32xf32>
    %cst_57 = arith.constant dense<0.000000e+00> : vector<8xf32>
    %136 = vector.multi_reduction <add>, %135, %cst_57 [1] : vector<8x32xf32> to vector<8xf32>
    %137 = vector.shape_cast %136 : vector<8xf32> to vector<8x1xf32>
    %cst_58 = arith.constant 3.200000e+01 : f32
    %138 = vector.broadcast %cst_58 : f32 to vector<8x1xf32>
    %139 = arith.divf %137, %138 : vector<8x1xf32>
    %140 = vector.broadcast %132 : vector<8x1xf32> to vector<8x32xf32>
    %141 = arith.subf %126, %140 : vector<8x32xf32>
    %cst_59 = arith.constant 9.99999974E-6 : f32
    %142 = vector.broadcast %cst_59 : f32 to vector<8x1xf32>
    %143 = arith.addf %139, %142 : vector<8x1xf32>
    %144 = math.rsqrt %143 : vector<8x1xf32>
    %145 = vector.broadcast %144 : vector<8x1xf32> to vector<8x32xf32>
    %146 = arith.mulf %141, %145 : vector<8x32xf32>
    %147 = vector.broadcast %127 : vector<1x32xf32> to vector<8x32xf32>
    %148 = arith.mulf %146, %147 : vector<8x32xf32>
    %149 = vector.broadcast %128 : vector<1x32xf32> to vector<8x32xf32>
    %150 = arith.addf %148, %149 : vector<8x32xf32>
    %c248 = arith.constant 248 : index
    %c0_60 = arith.constant 0 : index
    %151 = vector.load %arg1[%c248, %c0_60] : memref<488x128xf32, #tpu.memory_space<vmem>>, vector<32x96xf32>
    %cst_61 = arith.constant dense<0.000000e+00> : vector<8x96xf32>
    %152 = tpu.matmul %150, %151, %cst_61 {dimension_numbers = #tpu.dot_dimension_numbers<[1], [0], [0], [1], [0, 0, 1, 1], [], []>} : vector<8x32xf32>, vector<32x96xf32>, vector<8x96xf32> -> vector<8x96xf32>
    %c280 = arith.constant 280 : index
    %c0_62 = arith.constant 0 : index
    %153 = vector.load %arg1[%c280, %c0_62] : memref<488x128xf32, #tpu.memory_space<vmem>>, vector<1x96xf32>
    %154 = vector.broadcast %153 : vector<1x96xf32> to vector<8x96xf32>
    %155 = arith.addf %152, %154 : vector<8x96xf32>
    %156 = vector.extract_strided_slice %155 {offsets = [0, 0], sizes = [8, 8], strides = [1, 1]} : vector<8x96xf32> to vector<8x8xf32>
    %157 = vector.extract_strided_slice %155 {offsets = [0, 32], sizes = [8, 8], strides = [1, 1]} : vector<8x96xf32> to vector<8x8xf32>
    %158 = vector.extract_strided_slice %155 {offsets = [0, 64], sizes = [8, 8], strides = [1, 1]} : vector<8x96xf32> to vector<8x8xf32>
    %cst_63 = arith.constant dense<0.000000e+00> : vector<8x8xf32>
    %159 = tpu.matmul %156, %157, %cst_63 {dimension_numbers = #tpu.dot_dimension_numbers<[1], [1], [0], [0], [0, 0, 1, 0], [], []>} : vector<8x8xf32>, vector<8x8xf32>, vector<8x8xf32> -> vector<8x8xf32>
    %cst_64 = arith.constant 0.353553385 : f32
    %160 = vector.broadcast %cst_64 : f32 to vector<8x8xf32>
    %161 = arith.mulf %159, %160 : vector<8x8xf32>
    %cst_65 = arith.constant dense<0xFF800000> : vector<8xf32>
    %162 = vector.multi_reduction <maximumf>, %161, %cst_65 [1] : vector<8x8xf32> to vector<8xf32>
    %163 = vector.shape_cast %162 : vector<8xf32> to vector<8x1xf32>
    %164 = vector.broadcast %163 : vector<8x1xf32> to vector<8x8xf32>
    %165 = arith.subf %161, %164 : vector<8x8xf32>
    %166 = math.exp %165 : vector<8x8xf32>
    %cst_66 = arith.constant dense<0.000000e+00> : vector<8xf32>
    %167 = vector.multi_reduction <add>, %166, %cst_66 [1] : vector<8x8xf32> to vector<8xf32>
    %168 = vector.shape_cast %167 : vector<8xf32> to vector<8x1xf32>
    %169 = tpu.reciprocal %168 {approx = true} : vector<8x1xf32> -> vector<8x1xf32>
    %170 = vector.broadcast %169 : vector<8x1xf32> to vector<8x8xf32>
    %171 = arith.mulf %166, %170 : vector<8x8xf32>
    %cst_67 = arith.constant dense<0.000000e+00> : vector<8x8xf32>
    %172 = tpu.matmul %171, %158, %cst_67 {dimension_numbers = #tpu.dot_dimension_numbers<[1], [0], [0], [1], [0, 0, 1, 1], [], []>} : vector<8x8xf32>, vector<8x8xf32>, vector<8x8xf32> -> vector<8x8xf32>
    %c0_68 = arith.constant 0 : index
    %c0_69 = arith.constant 0 : index
    %173 = vector.load %arg3[%c0_68, %c0_69] : memref<8x32xf32, #tpu.memory_space<vmem>>, vector<8x8xf32>
    tpu.vector_store %arg3[%c0_68, %c0_69], %172 {strides = array<i32>} : memref<8x32xf32, #tpu.memory_space<vmem>>, vector<8x8xf32>,
    %174 = vector.extract_strided_slice %155 {offsets = [0, 8], sizes = [8, 8], strides = [1, 1]} : vector<8x96xf32> to vector<8x8xf32>
    %175 = vector.extract_strided_slice %155 {offsets = [0, 40], sizes = [8, 8], strides = [1, 1]} : vector<8x96xf32> to vector<8x8xf32>
    %176 = vector.extract_strided_slice %155 {offsets = [0, 72], sizes = [8, 8], strides = [1, 1]} : vector<8x96xf32> to vector<8x8xf32>
    %cst_70 = arith.constant dense<0.000000e+00> : vector<8x8xf32>
    %177 = tpu.matmul %174, %175, %cst_70 {dimension_numbers = #tpu.dot_dimension_numbers<[1], [1], [0], [0], [0, 0, 1, 0], [], []>} : vector<8x8xf32>, vector<8x8xf32>, vector<8x8xf32> -> vector<8x8xf32>
    %cst_71 = arith.constant 0.353553385 : f32
    %178 = vector.broadcast %cst_71 : f32 to vector<8x8xf32>
    %179 = arith.mulf %177, %178 : vector<8x8xf32>
    %cst_72 = arith.constant dense<0xFF800000> : vector<8xf32>
    %180 = vector.multi_reduction <maximumf>, %179, %cst_72 [1] : vector<8x8xf32> to vector<8xf32>
    %181 = vector.shape_cast %180 : vector<8xf32> to vector<8x1xf32>
    %182 = vector.broadcast %181 : vector<8x1xf32> to vector<8x8xf32>
    %183 = arith.subf %179, %182 : vector<8x8xf32>
    %184 = math.exp %183 : vector<8x8xf32>
    %cst_73 = arith.constant dense<0.000000e+00> : vector<8xf32>
    %185 = vector.multi_reduction <add>, %184, %cst_73 [1] : vector<8x8xf32> to vector<8xf32>
    %186 = vector.shape_cast %185 : vector<8xf32> to vector<8x1xf32>
    %187 = tpu.reciprocal %186 {approx = true} : vector<8x1xf32> -> vector<8x1xf32>
    %188 = vector.broadcast %187 : vector<8x1xf32> to vector<8x8xf32>
    %189 = arith.mulf %184, %188 : vector<8x8xf32>
    %cst_74 = arith.constant dense<0.000000e+00> : vector<8x8xf32>
    %190 = tpu.matmul %189, %176, %cst_74 {dimension_numbers = #tpu.dot_dimension_numbers<[1], [0], [0], [1], [0, 0, 1, 1], [], []>} : vector<8x8xf32>, vector<8x8xf32>, vector<8x8xf32> -> vector<8x8xf32>
    %c0_75 = arith.constant 0 : index
    %c8_76 = arith.constant 8 : index
    %191 = vector.load %arg3[%c0_75, %c8_76] : memref<8x32xf32, #tpu.memory_space<vmem>>, vector<8x8xf32>
    tpu.vector_store %arg3[%c0_75, %c8_76], %190 {strides = array<i32>} : memref<8x32xf32, #tpu.memory_space<vmem>>, vector<8x8xf32>,
    %192 = vector.extract_strided_slice %155 {offsets = [0, 16], sizes = [8, 8], strides = [1, 1]} : vector<8x96xf32> to vector<8x8xf32>
    %193 = vector.extract_strided_slice %155 {offsets = [0, 48], sizes = [8, 8], strides = [1, 1]} : vector<8x96xf32> to vector<8x8xf32>
    %194 = vector.extract_strided_slice %155 {offsets = [0, 80], sizes = [8, 8], strides = [1, 1]} : vector<8x96xf32> to vector<8x8xf32>
    %cst_77 = arith.constant dense<0.000000e+00> : vector<8x8xf32>
    %195 = tpu.matmul %192, %193, %cst_77 {dimension_numbers = #tpu.dot_dimension_numbers<[1], [1], [0], [0], [0, 0, 1, 0], [], []>} : vector<8x8xf32>, vector<8x8xf32>, vector<8x8xf32> -> vector<8x8xf32>
    %cst_78 = arith.constant 0.353553385 : f32
    %196 = vector.broadcast %cst_78 : f32 to vector<8x8xf32>
    %197 = arith.mulf %195, %196 : vector<8x8xf32>
    %cst_79 = arith.constant dense<0xFF800000> : vector<8xf32>
    %198 = vector.multi_reduction <maximumf>, %197, %cst_79 [1] : vector<8x8xf32> to vector<8xf32>
    %199 = vector.shape_cast %198 : vector<8xf32> to vector<8x1xf32>
    %200 = vector.broadcast %199 : vector<8x1xf32> to vector<8x8xf32>
    %201 = arith.subf %197, %200 : vector<8x8xf32>
    %202 = math.exp %201 : vector<8x8xf32>
    %cst_80 = arith.constant dense<0.000000e+00> : vector<8xf32>
    %203 = vector.multi_reduction <add>, %202, %cst_80 [1] : vector<8x8xf32> to vector<8xf32>
    %204 = vector.shape_cast %203 : vector<8xf32> to vector<8x1xf32>
    %205 = tpu.reciprocal %204 {approx = true} : vector<8x1xf32> -> vector<8x1xf32>
    %206 = vector.broadcast %205 : vector<8x1xf32> to vector<8x8xf32>
    %207 = arith.mulf %202, %206 : vector<8x8xf32>
    %cst_81 = arith.constant dense<0.000000e+00> : vector<8x8xf32>
    %208 = tpu.matmul %207, %194, %cst_81 {dimension_numbers = #tpu.dot_dimension_numbers<[1], [0], [0], [1], [0, 0, 1, 1], [], []>} : vector<8x8xf32>, vector<8x8xf32>, vector<8x8xf32> -> vector<8x8xf32>
    %c0_82 = arith.constant 0 : index
    %c16_83 = arith.constant 16 : index
    %209 = vector.load %arg3[%c0_82, %c16_83] : memref<8x32xf32, #tpu.memory_space<vmem>>, vector<8x8xf32>
    tpu.vector_store %arg3[%c0_82, %c16_83], %208 {strides = array<i32>} : memref<8x32xf32, #tpu.memory_space<vmem>>, vector<8x8xf32>,
    %210 = vector.extract_strided_slice %155 {offsets = [0, 24], sizes = [8, 8], strides = [1, 1]} : vector<8x96xf32> to vector<8x8xf32>
    %211 = vector.extract_strided_slice %155 {offsets = [0, 56], sizes = [8, 8], strides = [1, 1]} : vector<8x96xf32> to vector<8x8xf32>
    %212 = vector.extract_strided_slice %155 {offsets = [0, 88], sizes = [8, 8], strides = [1, 1]} : vector<8x96xf32> to vector<8x8xf32>
    %cst_84 = arith.constant dense<0.000000e+00> : vector<8x8xf32>
    %213 = tpu.matmul %210, %211, %cst_84 {dimension_numbers = #tpu.dot_dimension_numbers<[1], [1], [0], [0], [0, 0, 1, 0], [], []>} : vector<8x8xf32>, vector<8x8xf32>, vector<8x8xf32> -> vector<8x8xf32>
    %cst_85 = arith.constant 0.353553385 : f32
    %214 = vector.broadcast %cst_85 : f32 to vector<8x8xf32>
    %215 = arith.mulf %213, %214 : vector<8x8xf32>
    %cst_86 = arith.constant dense<0xFF800000> : vector<8xf32>
    %216 = vector.multi_reduction <maximumf>, %215, %cst_86 [1] : vector<8x8xf32> to vector<8xf32>
    %217 = vector.shape_cast %216 : vector<8xf32> to vector<8x1xf32>
    %218 = vector.broadcast %217 : vector<8x1xf32> to vector<8x8xf32>
    %219 = arith.subf %215, %218 : vector<8x8xf32>
    %220 = math.exp %219 : vector<8x8xf32>
    %cst_87 = arith.constant dense<0.000000e+00> : vector<8xf32>
    %221 = vector.multi_reduction <add>, %220, %cst_87 [1] : vector<8x8xf32> to vector<8xf32>
    %222 = vector.shape_cast %221 : vector<8xf32> to vector<8x1xf32>
    %223 = tpu.reciprocal %222 {approx = true} : vector<8x1xf32> -> vector<8x1xf32>
    %224 = vector.broadcast %223 : vector<8x1xf32> to vector<8x8xf32>
    %225 = arith.mulf %220, %224 : vector<8x8xf32>
    %cst_88 = arith.constant dense<0.000000e+00> : vector<8x8xf32>
    %226 = tpu.matmul %225, %212, %cst_88 {dimension_numbers = #tpu.dot_dimension_numbers<[1], [0], [0], [1], [0, 0, 1, 1], [], []>} : vector<8x8xf32>, vector<8x8xf32>, vector<8x8xf32> -> vector<8x8xf32>
    %c0_89 = arith.constant 0 : index
    %c24_90 = arith.constant 24 : index
    %227 = vector.load %arg3[%c0_89, %c24_90] : memref<8x32xf32, #tpu.memory_space<vmem>>, vector<8x8xf32>
    tpu.vector_store %arg3[%c0_89, %c24_90], %226 {strides = array<i32>} : memref<8x32xf32, #tpu.memory_space<vmem>>, vector<8x8xf32>,
    %c0_91 = arith.constant 0 : index
    %c0_92 = arith.constant 0 : index
    %228 = vector.load %arg3[%c0_91, %c0_92] : memref<8x32xf32, #tpu.memory_space<vmem>>, vector<8x32xf32>
    %c288 = arith.constant 288 : index
    %c0_93 = arith.constant 0 : index
    %229 = vector.load %arg1[%c288, %c0_93] : memref<488x128xf32, #tpu.memory_space<vmem>>, vector<32x32xf32>
    %cst_94 = arith.constant dense<0.000000e+00> : vector<8x32xf32>
    %230 = tpu.matmul %228, %229, %cst_94 {dimension_numbers = #tpu.dot_dimension_numbers<[1], [0], [0], [1], [0, 0, 1, 1], [], []>} : vector<8x32xf32>, vector<32x32xf32>, vector<8x32xf32> -> vector<8x32xf32>
    %c320 = arith.constant 320 : index
    %c0_95 = arith.constant 0 : index
    %231 = vector.load %arg1[%c320, %c0_95] : memref<488x128xf32, #tpu.memory_space<vmem>>, vector<1x32xf32>
    %232 = vector.broadcast %231 : vector<1x32xf32> to vector<8x32xf32>
    %233 = arith.addf %230, %232 : vector<8x32xf32>
    %234 = arith.addf %150, %233 : vector<8x32xf32>
    %c328 = arith.constant 328 : index
    %c0_96 = arith.constant 0 : index
    %235 = vector.load %arg1[%c328, %c0_96] : memref<488x128xf32, #tpu.memory_space<vmem>>, vector<1x32xf32>
    %c336 = arith.constant 336 : index
    %c0_97 = arith.constant 0 : index
    %236 = vector.load %arg1[%c336, %c0_97] : memref<488x128xf32, #tpu.memory_space<vmem>>, vector<1x32xf32>
    %cst_98 = arith.constant dense<0.000000e+00> : vector<8xf32>
    %237 = vector.multi_reduction <add>, %234, %cst_98 [1] : vector<8x32xf32> to vector<8xf32>
    %238 = vector.shape_cast %237 : vector<8xf32> to vector<8x1xf32>
    %cst_99 = arith.constant 3.200000e+01 : f32
    %239 = vector.broadcast %cst_99 : f32 to vector<8x1xf32>
    %240 = arith.divf %238, %239 : vector<8x1xf32>
    %241 = vector.broadcast %240 : vector<8x1xf32> to vector<8x32xf32>
    %242 = arith.subf %234, %241 : vector<8x32xf32>
    %243 = arith.mulf %242, %242 : vector<8x32xf32>
    %cst_100 = arith.constant dense<0.000000e+00> : vector<8xf32>
    %244 = vector.multi_reduction <add>, %243, %cst_100 [1] : vector<8x32xf32> to vector<8xf32>
    %245 = vector.shape_cast %244 : vector<8xf32> to vector<8x1xf32>
    %cst_101 = arith.constant 3.200000e+01 : f32
    %246 = vector.broadcast %cst_101 : f32 to vector<8x1xf32>
    %247 = arith.divf %245, %246 : vector<8x1xf32>
    %248 = vector.broadcast %240 : vector<8x1xf32> to vector<8x32xf32>
    %249 = arith.subf %234, %248 : vector<8x32xf32>
    %cst_102 = arith.constant 9.99999974E-6 : f32
    %250 = vector.broadcast %cst_102 : f32 to vector<8x1xf32>
    %251 = arith.addf %247, %250 : vector<8x1xf32>
    %252 = math.rsqrt %251 : vector<8x1xf32>
    %253 = vector.broadcast %252 : vector<8x1xf32> to vector<8x32xf32>
    %254 = arith.mulf %249, %253 : vector<8x32xf32>
    %255 = vector.broadcast %235 : vector<1x32xf32> to vector<8x32xf32>
    %256 = arith.mulf %254, %255 : vector<8x32xf32>
    %257 = vector.broadcast %236 : vector<1x32xf32> to vector<8x32xf32>
    %258 = arith.addf %256, %257 : vector<8x32xf32>
    %c344 = arith.constant 344 : index
    %c0_103 = arith.constant 0 : index
    %259 = vector.load %arg1[%c344, %c0_103] : memref<488x128xf32, #tpu.memory_space<vmem>>, vector<32x64xf32>
    %cst_104 = arith.constant dense<0.000000e+00> : vector<8x64xf32>
    %260 = tpu.matmul %258, %259, %cst_104 {dimension_numbers = #tpu.dot_dimension_numbers<[1], [0], [0], [1], [0, 0, 1, 1], [], []>} : vector<8x32xf32>, vector<32x64xf32>, vector<8x64xf32> -> vector<8x64xf32>
    %c376 = arith.constant 376 : index
    %c0_105 = arith.constant 0 : index
    %261 = vector.load %arg1[%c376, %c0_105] : memref<488x128xf32, #tpu.memory_space<vmem>>, vector<1x64xf32>
    %262 = vector.broadcast %261 : vector<1x64xf32> to vector<8x64xf32>
    %263 = arith.addf %260, %262 : vector<8x64xf32>
    %cst_106 = arith.constant 0.000000e+00 : f32
    %264 = vector.broadcast %cst_106 : f32 to vector<8x64xf32>
    %265 = arith.maximumf %263, %264 : vector<8x64xf32>
    %c384 = arith.constant 384 : index
    %c0_107 = arith.constant 0 : index
    %266 = vector.load %arg1[%c384, %c0_107] : memref<488x128xf32, #tpu.memory_space<vmem>>, vector<64x32xf32>
    %cst_108 = arith.constant dense<0.000000e+00> : vector<8x32xf32>
    %267 = tpu.matmul %265, %266, %cst_108 {dimension_numbers = #tpu.dot_dimension_numbers<[1], [0], [0], [1], [0, 0, 1, 1], [], []>} : vector<8x64xf32>, vector<64x32xf32>, vector<8x32xf32> -> vector<8x32xf32>
    %c448 = arith.constant 448 : index
    %c0_109 = arith.constant 0 : index
    %268 = vector.load %arg1[%c448, %c0_109] : memref<488x128xf32, #tpu.memory_space<vmem>>, vector<1x32xf32>
    %269 = vector.broadcast %268 : vector<1x32xf32> to vector<8x32xf32>
    %270 = arith.addf %267, %269 : vector<8x32xf32>
    %271 = arith.addf %258, %270 : vector<8x32xf32>
    %c456 = arith.constant 456 : index
    %c0_110 = arith.constant 0 : index
    %272 = vector.load %arg1[%c456, %c0_110] : memref<488x128xf32, #tpu.memory_space<vmem>>, vector<1x32xf32>
    %c464 = arith.constant 464 : index
    %c0_111 = arith.constant 0 : index
    %273 = vector.load %arg1[%c464, %c0_111] : memref<488x128xf32, #tpu.memory_space<vmem>>, vector<1x32xf32>
    %cst_112 = arith.constant dense<0.000000e+00> : vector<8xf32>
    %274 = vector.multi_reduction <add>, %271, %cst_112 [1] : vector<8x32xf32> to vector<8xf32>
    %275 = vector.shape_cast %274 : vector<8xf32> to vector<8x1xf32>
    %cst_113 = arith.constant 3.200000e+01 : f32
    %276 = vector.broadcast %cst_113 : f32 to vector<8x1xf32>
    %277 = arith.divf %275, %276 : vector<8x1xf32>
    %278 = vector.broadcast %277 : vector<8x1xf32> to vector<8x32xf32>
    %279 = arith.subf %271, %278 : vector<8x32xf32>
    %280 = arith.mulf %279, %279 : vector<8x32xf32>
    %cst_114 = arith.constant dense<0.000000e+00> : vector<8xf32>
    %281 = vector.multi_reduction <add>, %280, %cst_114 [1] : vector<8x32xf32> to vector<8xf32>
    %282 = vector.shape_cast %281 : vector<8xf32> to vector<8x1xf32>
    %cst_115 = arith.constant 3.200000e+01 : f32
    %283 = vector.broadcast %cst_115 : f32 to vector<8x1xf32>
    %284 = arith.divf %282, %283 : vector<8x1xf32>
    %285 = vector.broadcast %277 : vector<8x1xf32> to vector<8x32xf32>
    %286 = arith.subf %271, %285 : vector<8x32xf32>
    %cst_116 = arith.constant 9.99999974E-6 : f32
    %287 = vector.broadcast %cst_116 : f32 to vector<8x1xf32>
    %288 = arith.addf %284, %287 : vector<8x1xf32>
    %289 = math.rsqrt %288 : vector<8x1xf32>
    %290 = vector.broadcast %289 : vector<8x1xf32> to vector<8x32xf32>
    %291 = arith.mulf %286, %290 : vector<8x32xf32>
    %292 = vector.broadcast %272 : vector<1x32xf32> to vector<8x32xf32>
    %293 = arith.mulf %291, %292 : vector<8x32xf32>
    %294 = vector.broadcast %273 : vector<1x32xf32> to vector<8x32xf32>
    %295 = arith.addf %293, %294 : vector<8x32xf32>
    %c472 = arith.constant 472 : index
    %c0_117 = arith.constant 0 : index
    %296 = vector.load %arg1[%c472, %c0_117] : memref<488x128xf32, #tpu.memory_space<vmem>>, vector<1x32xf32>
    %cst_118 = arith.constant dense<0.000000e+00> : vector<1x8xf32>
    %297 = tpu.matmul %296, %295, %cst_118 {dimension_numbers = #tpu.dot_dimension_numbers<[1], [1], [0], [0], [0, 0, 1, 0], [], []>} : vector<1x32xf32>, vector<8x32xf32>, vector<1x8xf32> -> vector<1x8xf32>
    %c480 = arith.constant 480 : index
    %c0_119 = arith.constant 0 : index
    %298 = vector.load %arg1[%c480, %c0_119] : memref<488x128xf32, #tpu.memory_space<vmem>>, vector<1x1xf32>
    %299 = vector.broadcast %298 : vector<1x1xf32> to vector<1x8xf32>
    %300 = arith.addf %297, %299 : vector<1x8xf32>
    %c0_120 = arith.constant 0 : index
    %c0_121 = arith.constant 0 : index
    %301 = vector.load %arg2[%c0_120, %c0_121] : memref<1x8xf32, #tpu.memory_space<vmem>>, vector<1x8xf32>
    tpu.vector_store %arg2[%c0_120, %c0_121], %300 {strides = array<i32>} : memref<1x8xf32, #tpu.memory_space<vmem>>, vector<1x8xf32>,
    return
  }
}

</mosaic_0001>

<llo_original>
// kernel: tpu_custom_call.1
$region0: #{tpu_custom_call.1}
  #allocation0 [shape = 'u32[]', space=smem, size = 0x4, offset = 0x4, fixed_abs, tag = 'smem constant byte address 0x4 - core index']
  #allocation1 [shape = 'u32[144,128]{1,0:T(1,128)}', space=vmem, size = 0x12000, scoped, tag = 'internal scratch']
  #allocation2 [shape = 'f32[8,32]{1,0:T(8,128)}', space=vmem, size = 0x1000, scoped, tag = 'scratch operand']
  %s0 = inlined_call_operand.hbm [shape: f32[8,16], index: 0, kind: input, shape index: {}]
  %s1 = inlined_call_operand.hbm [shape: f32[488,128], index: 1, kind: input, shape index: {}]
  %s2 = inlined_call_operand.hbm [shape: f32[1,8], index: 2, kind: output, shape index: {}]
  %s3 = sld [smem:[#allocation0]]
  $region26: #{tpu_custom_call.1} parent=0
    _
  %s5 = ssub.s32 1, %s3
  %s6 = scalar_select 0, %s5, %s3
  $region1: #{tpu_custom_call.1} parent=0
    #allocation3 [shape = 'u8[4096]{0}', space=vmem, size = 0x1000, scoped, tag = 'input window, operand 0, single buffered']
    #allocation4 [shape = 's32[1]{0}', space=sflag, size = 0x4, scoped, tag = 'scoped memory for tpu_custom_call.1']
    #allocation5 [shape = 's32[1]{0}', space=sflag, size = 0x4, scoped, tag = 'scoped memory for tpu_custom_call.1']
    #allocation6 [shape = 'u8[249856]{0}', space=vmem, size = 0x3d000, scoped, tag = 'input window, operand 1, single buffered']
    #allocation7 [shape = 's32[1]{0}', space=sflag, size = 0x4, scoped, tag = 'scoped memory for tpu_custom_call.1']
    #allocation8 [shape = 'u8[512]{0}', space=vmem, size = 0x400, scoped, tag = 'output window, operand 0, single buffered']
    %7 = vsyncpa [#allocation4], 0
    %8 = vsyncpa [#allocation7], 0
    %9 = vsyncpa [#allocation5], 0
    // Predicated region
    $region2: #{tpu_custom_call.1} parent=1 // pred_check
      _
    $region3: #{tpu_custom_call.1} parent=1 // pred_check_branch
      %11 = sbr.rel (0) target = $region5
    $region4: #{tpu_custom_call.1} parent=1 // pred_region
      %s13 = ssub.s32 128, 128
      %14 = vsyncadd [#allocation4], %s13
      %s16 = sshll.u32 [#allocation3], 4
      %s17 = int_to_ptr.vmem [resolvable:$true] %s16
      %19 = dma.hbm_to_vmem [thread:$0]  %s0, 128, %s17, [#allocation4]
    $region5: #{tpu_custom_call.1} parent=1 // pred_fallthru
      _
    // Predicated region
    $region6: #{tpu_custom_call.1} parent=1 // pred_check
      _
    $region7: #{tpu_custom_call.1} parent=1 // pred_check_branch
      %21 = sbr.rel (0) target = $region9
    $region8: #{tpu_custom_call.1} parent=1 // pred_region
      %s23 = ssub.s32 7808, 7808
      %24 = vsyncadd [#allocation7], %s23
      %s25 = sshll.u32 [#allocation6], 4
      %s26 = int_to_ptr.vmem [resolvable:$true] %s25
      %31 = dma.hbm_to_vmem [thread:$0]  %s1, 7808, %s26, [#allocation7], 128, 128, 8
    $region9: #{tpu_custom_call.1} parent=1 // pred_fallthru
      _
    // Predicated region
    $region10: #{tpu_custom_call.1} parent=1 // pred_check
      _
    $region11: #{tpu_custom_call.1} parent=1 // pred_check_branch
      %33 = sbr.rel (0) target = $region13
    $region12: #{tpu_custom_call.1} parent=1 // pred_region
      %34 = dma.done [#allocation4], 128
    $region13: #{tpu_custom_call.1} parent=1 // pred_fallthru
      _
    // Predicated region
    $region14: #{tpu_custom_call.1} parent=1 // pred_check
      _
    $region15: #{tpu_custom_call.1} parent=1 // pred_check_branch
      %36 = sbr.rel (0) target = $region17
    $region16: #{tpu_custom_call.1} parent=1 // pred_region
      %37 = dma.done [#allocation7], 7808
    $region17: #{tpu_custom_call.1} parent=1 // pred_fallthru
      _
    %v38 = vld [vmem:[#allocation3] sm:$0xff]
    %v39 = vld [vmem:[#allocation6] sm:$0xff]
    %v40 = vld [vmem:[#allocation6 + $0x8] sm:$0xff]
    %v41 = vld [vmem:[#allocation6 + $0x10] sm:$0x1]
    %v42 = vlaneseq
    %v43 = vshrl.u32 %v42, 7
    %v44 = vsub.s32 0, %v43
    %v45 = vrot.slane %v41, %v44
    %vm46 = vcmask 130048
    %v48 = vsel %vm46, %v38, 0
    %50 = vmatprep.subr.mxu0 0.0
    %51 = vmatpush1.msra.mxu0 0.0
    %52 = vmatprep.subr.mxu0 0.0
    %53 = vmatpush1.msra.mxu0 0.0
    %54 = vmatprep.subr.mxu0 0.0
    %55 = vmatpush1.msra.mxu0 0.0
    %56 = vmatprep.subr.mxu0 0.0
    %57 = vmatpush1.msra.mxu0 0.0
    %58 = vmatprep.subr.mxu0 0.0
    %59 = vmatpush1.msra.mxu0 0.0
    %60 = vmatprep.subr.mxu0 0.0
    %61 = vmatpush1.msra.mxu0 0.0
    %62 = vmatprep.subr.mxu0 0.0
    %63 = vmatpush1.msra.mxu0 0.0
    %64 = vmatprep.subr.mxu0 0.0
    %65 = vmatpush1.msra.mxu0 0.0
    %66 = vmatprep.subr.mxu0 0.0
    %67 = vmatpush1.msra.mxu0 0.0
    %68 = vmatprep.subr.mxu0 0.0
    %69 = vmatpush1.msra.mxu0 0.0
    %70 = vmatprep.subr.mxu0 0.0
    %71 = vmatpush1.msra.mxu0 0.0
    %72 = vmatprep.subr.mxu0 0.0
    %73 = vmatpush1.msra.mxu0 0.0
    %74 = vmatprep.subr.mxu0 0.0
    %75 = vmatpush1.msra.mxu0 0.0
    %76 = vmatprep.subr.mxu0 0.0
    %77 = vmatpush1.msra.mxu0 0.0
    %78 = vmatprep.subr.mxu0 0.0
    %79 = vmatpush1.msra.mxu0 %v40
    %80 = vmatprep.subr.mxu0 0.0
    %81 = vmatpush1.msra.mxu0 %v39
    %82 = vmatprep.subr.mxu0 0.0
    %83 = vmatpush2.msra.mxu0 0.0
    %84 = vmatprep.subr.mxu0 0.0
    %85 = vmatpush2.msra.mxu0 0.0
    %86 = vmatprep.subr.mxu0 0.0
    %87 = vmatpush2.msra.mxu0 0.0
    %88 = vmatprep.subr.mxu0 0.0
    %89 = vmatpush2.msra.mxu0 0.0
    %90 = vmatprep.subr.mxu0 0.0
    %91 = vmatpush2.msra.mxu0 0.0
    %92 = vmatprep.subr.mxu0 0.0
    %93 = vmatpush2.msra.mxu0 0.0
    %94 = vmatprep.subr.mxu0 0.0
    %95 = vmatpush2.msra.mxu0 0.0
    %96 = vmatprep.subr.mxu0 0.0
    %97 = vmatpush2.msra.mxu0 0.0
    %98 = vmatprep.subr.mxu0 0.0
    %99 = vmatpush2.msra.mxu0 0.0
    %100 = vmatprep.subr.mxu0 0.0
    %101 = vmatpush2.msra.mxu0 0.0
    %102 = vmatprep.subr.mxu0 0.0
    %103 = vmatpush2.msra.mxu0 0.0
    %104 = vmatprep.subr.mxu0 0.0
    %105 = vmatpush2.msra.mxu0 0.0
    %106 = vmatprep.subr.mxu0 0.0
    %107 = vmatpush2.msra.mxu0 0.0
    %108 = vmatprep.subr.mxu0 0.0
    %109 = vmatpush2.msra.mxu0 0.0
    %110 = vmatprep.subr.mxu0 0.0
    %111 = vmatpush2.msra.mxu0 0.0
    %112 = vmatprep.subr.mxu0 0.0
    %113 = vmatpush2.msra.mxu0 0.0
    %114 = vmatprep.mubr.f32.mxu0 0.0
    %115 = vmatmul.mubr.f32.gmra.mxu0 %v48
    %v116 = vpop.f32.mrf.mxu0
    %v117 = vadd.f32 %v45, %v116
    %v118 = vpop.f32.mrf.mxu0
    %119 = vdwg.mxu0
    %v120 = vld [vmem:[#allocation6 + $0x18] sm:$0xff]
    %v121 = vld [vmem:[#allocation6 + $0x20] sm:$0xff]
    %v122 = vld [vmem:[#allocation6 + $0x28] sm:$0xff]
    %v123 = vld [vmem:[#allocation6 + $0x30] sm:$0xff]
    %v124 = vld [vmem:[#allocation6 + $0x38] sm:$0x1]
    %v125 = vlaneseq
    %v126 = vshrl.u32 %v125, 7
    %v127 = vsub.s32 0, %v126
    %v128 = vrot.slane %v124, %v127
    %vm129 = vcmask 261120
    %v131 = vsel %vm129, %v117, 0
    %133 = vmatprep.subr.mxu0 0.0
    %134 = vmatpush1.msra.mxu0 0.0
    %135 = vmatprep.subr.mxu0 0.0
    %136 = vmatpush1.msra.mxu0 0.0
    %137 = vmatprep.subr.mxu0 0.0
    %138 = vmatpush1.msra.mxu0 0.0
    %139 = vmatprep.subr.mxu0 0.0
    %140 = vmatpush1.msra.mxu0 0.0
    %141 = vmatprep.subr.mxu0 0.0
    %142 = vmatpush1.msra.mxu0 0.0
    %143 = vmatprep.subr.mxu0 0.0
    %144 = vmatpush1.msra.mxu0 0.0
    %145 = vmatprep.subr.mxu0 0.0
    %146 = vmatpush1.msra.mxu0 0.0
    %147 = vmatprep.subr.mxu0 0.0
    %148 = vmatpush1.msra.mxu0 0.0
    %149 = vmatprep.subr.mxu0 0.0
    %150 = vmatpush1.msra.mxu0 0.0
    %151 = vmatprep.subr.mxu0 0.0
    %152 = vmatpush1.msra.mxu0 0.0
    %153 = vmatprep.subr.mxu0 0.0
    %154 = vmatpush1.msra.mxu0 0.0
    %155 = vmatprep.subr.mxu0 0.0
    %156 = vmatpush1.msra.mxu0 0.0
    %157 = vmatprep.subr.mxu0 0.0
    %158 = vmatpush1.msra.mxu0 %v123
    %159 = vmatprep.subr.mxu0 0.0
    %160 = vmatpush1.msra.mxu0 %v122
    %161 = vmatprep.subr.mxu0 0.0
    %162 = vmatpush1.msra.mxu0 %v121
    %163 = vmatprep.subr.mxu0 0.0
    %164 = vmatpush1.msra.mxu0 %v120
    %165 = vmatprep.subr.mxu0 0.0
    %166 = vmatpush2.msra.mxu0 0.0
    %167 = vmatprep.subr.mxu0 0.0
    %168 = vmatpush2.msra.mxu0 0.0
    %169 = vmatprep.subr.mxu0 0.0
    %170 = vmatpush2.msra.mxu0 0.0
    %171 = vmatprep.subr.mxu0 0.0
    %172 = vmatpush2.msra.mxu0 0.0
    %173 = vmatprep.subr.mxu0 0.0
    %174 = vmatpush2.msra.mxu0 0.0
    %175 = vmatprep.subr.mxu0 0.0
    %176 = vmatpush2.msra.mxu0 0.0
    %177 = vmatprep.subr.mxu0 0.0
    %178 = vmatpush2.msra.mxu0 0.0
    %179 = vmatprep.subr.mxu0 0.0
    %180 = vmatpush2.msra.mxu0 0.0
    %181 = vmatprep.subr.mxu0 0.0
    %182 = vmatpush2.msra.mxu0 0.0
    %183 = vmatprep.subr.mxu0 0.0
    %184 = vmatpush2.msra.mxu0 0.0
    %185 = vmatprep.subr.mxu0 0.0
    %186 = vmatpush2.msra.mxu0 0.0
    %187 = vmatprep.subr.mxu0 0.0
    %188 = vmatpush2.msra.mxu0 0.0
    %189 = vmatprep.subr.mxu0 0.0
    %190 = vmatpush2.msra.mxu0 0.0
    %191 = vmatprep.subr.mxu0 0.0
    %192 = vmatpush2.msra.mxu0 0.0
    %193 = vmatprep.subr.mxu0 0.0
    %194 = vmatpush2.msra.mxu0 0.0
    %195 = vmatprep.subr.mxu0 0.0
    %196 = vmatpush2.msra.mxu0 0.0
    %197 = vmatprep.mubr.f32.mxu0 0.0
    %198 = vmatmul.mubr.f32.gmra.mxu0 %v131
    %v199 = vpop.f32.mrf.mxu0
    %v200 = vadd.f32 %v128, %v199
    %v201 = vpop.f32.mrf.mxu0
    %202 = vdwg.mxu0
    %204 = vrot.lane.b32.xlu0 %v200, 96
    %v205 = vpop.permute.xlu0 %204
    %vm206 = vcmask 64512
    %v207 = vsel %vm206, %v200, 0
    %v209 = vsel %vm206, %v205, 0
    %211 = vmatprep.subr.mxu0 0.0
    %212 = vmatpush1.xpose.msra.mxu0 0.0
    %213 = vmatprep.subr.mxu0 0.0
    %214 = vmatpush1.xpose.msra.mxu0 0.0
    %215 = vmatprep.subr.mxu0 0.0
    %216 = vmatpush1.xpose.msra.mxu0 0.0
    %217 = vmatprep.subr.mxu0 0.0
    %218 = vmatpush1.xpose.msra.mxu0 0.0
    %219 = vmatprep.subr.mxu0 0.0
    %220 = vmatpush1.xpose.msra.mxu0 0.0
    %221 = vmatprep.subr.mxu0 0.0
    %222 = vmatpush1.xpose.msra.mxu0 0.0
    %223 = vmatprep.subr.mxu0 0.0
    %224 = vmatpush1.xpose.msra.mxu0 0.0
    %225 = vmatprep.subr.mxu0 0.0
    %226 = vmatpush1.xpose.msra.mxu0 0.0
    %227 = vmatprep.subr.mxu0 0.0
    %228 = vmatpush1.xpose.msra.mxu0 0.0
    %229 = vmatprep.subr.mxu0 0.0
    %230 = vmatpush1.xpose.msra.mxu0 0.0
    %231 = vmatprep.subr.mxu0 0.0
    %232 = vmatpush1.xpose.msra.mxu0 0.0
    %233 = vmatprep.subr.mxu0 0.0
    %234 = vmatpush1.xpose.msra.mxu0 0.0
    %235 = vmatprep.subr.mxu0 0.0
    %236 = vmatpush1.xpose.msra.mxu0 0.0
    %237 = vmatprep.subr.mxu0 0.0
    %238 = vmatpush1.xpose.msra.mxu0 0.0
    %239 = vmatprep.subr.mxu0 0.0
    %240 = vmatpush1.xpose.msra.mxu0 0.0
    %241 = vmatprep.subr.mxu0 0.0
    %242 = vmatpush1.xpose.msra.mxu0 %v209
    %243 = vmatprep.subr.mxu0 0.0
    %244 = vmatpush2.xpose.msra.mxu0 0.0
    %245 = vmatprep.subr.mxu0 0.0
    %246 = vmatpush2.xpose.msra.mxu0 0.0
    %247 = vmatprep.subr.mxu0 0.0
    %248 = vmatpush2.xpose.msra.mxu0 0.0
    %249 = vmatprep.subr.mxu0 0.0
    %250 = vmatpush2.xpose.msra.mxu0 0.0
    %251 = vmatprep.subr.mxu0 0.0
    %252 = vmatpush2.xpose.msra.mxu0 0.0
    %253 = vmatprep.subr.mxu0 0.0
    %254 = vmatpush2.xpose.msra.mxu0 0.0
    %255 = vmatprep.subr.mxu0 0.0
    %256 = vmatpush2.xpose.msra.mxu0 0.0
    %257 = vmatprep.subr.mxu0 0.0
    %258 = vmatpush2.xpose.msra.mxu0 0.0
    %259 = vmatprep.subr.mxu0 0.0
    %260 = vmatpush2.xpose.msra.mxu0 0.0
    %261 = vmatprep.subr.mxu0 0.0
    %262 = vmatpush2.xpose.msra.mxu0 0.0
    %263 = vmatprep.subr.mxu0 0.0
    %264 = vmatpush2.xpose.msra.mxu0 0.0
    %265 = vmatprep.subr.mxu0 0.0
    %266 = vmatpush2.xpose.msra.mxu0 0.0
    %267 = vmatprep.subr.mxu0 0.0
    %268 = vmatpush2.xpose.msra.mxu0 0.0
    %269 = vmatprep.subr.mxu0 0.0
    %270 = vmatpush2.xpose.msra.mxu0 0.0
    %271 = vmatprep.subr.mxu0 0.0
    %272 = vmatpush2.xpose.msra.mxu0 0.0
    %273 = vmatprep.subr.mxu0 0.0
    %274 = vmatpush2.xpose.msra.mxu0 0.0
    %275 = vmatprep.mubr.f32.mxu0 0.0
    %276 = vmatmul.mubr.f32.gmra.mxu0 %v207
    %v277 = vpop.f32.mrf.mxu0
    %v278 = vadd.f32 0.0, %v277
    %v279 = vpop.f32.mrf.mxu0
    %280 = vdwg.mxu0
    %v281 = vmul.f32 %v278, 0.35355338
    %v282 = vsel %vm206, %v281, -inf
    %283 = vmax.xlane.f32.xlu0 %v282
    %v284 = vpop.xlane.xlu0 %283
    %v285 = vsub.f32 %v281, %v284
    %v286 = vmul.f32 %v285, 1.442695
    %v287 = vpow.pop %v286
    %v288 = vsel %vm206, %v287, 0.0
    %289 = vadd.xlane.f32.xlu0 %v288
    %v290 = vpop.xlane.xlu0 %289
    %v291 = vrcp.pop %v290
    %v292 = vmul.f32 %v287, %v291
    %293 = vrot.lane.b32.xlu0 %v200, 64
    %v294 = vpop.permute.xlu0 %293
    %v297 = vsel %vm206, %v292, 0
    %299 = vmatprep.subr.mxu0 0.0
    %300 = vmatpush1.msra.mxu0 0.0
    %301 = vmatprep.subr.mxu0 0.0
    %302 = vmatpush1.msra.mxu0 0.0
    %303 = vmatprep.subr.mxu0 0.0
    %304 = vmatpush1.msra.mxu0 0.0
    %305 = vmatprep.subr.mxu0 0.0
    %306 = vmatpush1.msra.mxu0 0.0
    %307 = vmatprep.subr.mxu0 0.0
    %308 = vmatpush1.msra.mxu0 0.0
    %309 = vmatprep.subr.mxu0 0.0
    %310 = vmatpush1.msra.mxu0 0.0
    %311 = vmatprep.subr.mxu0 0.0
    %312 = vmatpush1.msra.mxu0 0.0
    %313 = vmatprep.subr.mxu0 0.0
    %314 = vmatpush1.msra.mxu0 0.0
    %315 = vmatprep.subr.mxu0 0.0
    %316 = vmatpush1.msra.mxu0 0.0
    %317 = vmatprep.subr.mxu0 0.0
    %318 = vmatpush1.msra.mxu0 0.0
    %319 = vmatprep.subr.mxu0 0.0
    %320 = vmatpush1.msra.mxu0 0.0
    %321 = vmatprep.subr.mxu0 0.0
    %322 = vmatpush1.msra.mxu0 0.0
    %323 = vmatprep.subr.mxu0 0.0
    %324 = vmatpush1.msra.mxu0 0.0
    %325 = vmatprep.subr.mxu0 0.0
    %326 = vmatpush1.msra.mxu0 0.0
    %327 = vmatprep.subr.mxu0 0.0
    %328 = vmatpush1.msra.mxu0 0.0
    %329 = vmatprep.subr.mxu0 0.0
    %330 = vmatpush1.msra.mxu0 %v294
    %331 = vmatprep.subr.mxu0 0.0
    %332 = vmatpush2.msra.mxu0 0.0
    %333 = vmatprep.subr.mxu0 0.0
    %334 = vmatpush2.msra.mxu0 0.0
    %335 = vmatprep.subr.mxu0 0.0
    %336 = vmatpush2.msra.mxu0 0.0
    %337 = vmatprep.subr.mxu0 0.0
    %338 = vmatpush2.msra.mxu0 0.0
    %339 = vmatprep.subr.mxu0 0.0
    %340 = vmatpush2.msra.mxu0 0.0
    %341 = vmatprep.subr.mxu0 0.0
    %342 = vmatpush2.msra.mxu0 0.0
    %343 = vmatprep.subr.mxu0 0.0
    %344 = vmatpush2.msra.mxu0 0.0
    %345 = vmatprep.subr.mxu0 0.0
    %346 = vmatpush2.msra.mxu0 0.0
    %347 = vmatprep.subr.mxu0 0.0
    %348 = vmatpush2.msra.mxu0 0.0
    %349 = vmatprep.subr.mxu0 0.0
    %350 = vmatpush2.msra.mxu0 0.0
    %351 = vmatprep.subr.mxu0 0.0
    %352 = vmatpush2.msra.mxu0 0.0
    %353 = vmatprep.subr.mxu0 0.0
    %354 = vmatpush2.msra.mxu0 0.0
    %355 = vmatprep.subr.mxu0 0.0
    %356 = vmatpush2.msra.mxu0 0.0
    %357 = vmatprep.subr.mxu0 0.0
    %358 = vmatpush2.msra.mxu0 0.0
    %359 = vmatprep.subr.mxu0 0.0
    %360 = vmatpush2.msra.mxu0 0.0
    %361 = vmatprep.subr.mxu0 0.0
    %362 = vmatpush2.msra.mxu0 0.0
    %363 = vmatprep.mubr.f32.mxu0 0.0
    %364 = vmatmul.mubr.f32.gmra.mxu0 %v297
    %v365 = vpop.f32.mrf.mxu0
    %v366 = vadd.f32 0.0, %v365
    %v367 = vpop.f32.mrf.mxu0
    %368 = vdwg.mxu0
    %369 = vst.msk [vmem:[#allocation2] sm:$0xff] %vm206, %v366
    %370 = vrot.lane.b32.xlu0 %v200, 120
    %v371 = vpop.permute.xlu0 %370
    %372 = vrot.lane.b32.xlu0 %v200, 88
    %v373 = vpop.permute.xlu0 %372
    %v374 = vsel %vm206, %v371, 0
    %v376 = vsel %vm206, %v373, 0
    %378 = vmatprep.subr.mxu0 0.0
    %379 = vmatpush1.xpose.msra.mxu0 0.0
    %380 = vmatprep.subr.mxu0 0.0
    %381 = vmatpush1.xpose.msra.mxu0 0.0
    %382 = vmatprep.subr.mxu0 0.0
    %383 = vmatpush1.xpose.msra.mxu0 0.0
    %384 = vmatprep.subr.mxu0 0.0
    %385 = vmatpush1.xpose.msra.mxu0 0.0
    %386 = vmatprep.subr.mxu0 0.0
    %387 = vmatpush1.xpose.msra.mxu0 0.0
    %388 = vmatprep.subr.mxu0 0.0
    %389 = vmatpush1.xpose.msra.mxu0 0.0
    %390 = vmatprep.subr.mxu0 0.0
    %391 = vmatpush1.xpose.msra.mxu0 0.0
    %392 = vmatprep.subr.mxu0 0.0
    %393 = vmatpush1.xpose.msra.mxu0 0.0
    %394 = vmatprep.subr.mxu0 0.0
    %395 = vmatpush1.xpose.msra.mxu0 0.0
    %396 = vmatprep.subr.mxu0 0.0
    %397 = vmatpush1.xpose.msra.mxu0 0.0
    %398 = vmatprep.subr.mxu0 0.0
    %399 = vmatpush1.xpose.msra.mxu0 0.0
    %400 = vmatprep.subr.mxu0 0.0
    %401 = vmatpush1.xpose.msra.mxu0 0.0
    %402 = vmatprep.subr.mxu0 0.0
    %403 = vmatpush1.xpose.msra.mxu0 0.0
    %404 = vmatprep.subr.mxu0 0.0
    %405 = vmatpush1.xpose.msra.mxu0 0.0
    %406 = vmatprep.subr.mxu0 0.0
    %407 = vmatpush1.xpose.msra.mxu0 0.0
    %408 = vmatprep.subr.mxu0 0.0
    %409 = vmatpush1.xpose.msra.mxu0 %v376
    %410 = vmatprep.subr.mxu0 0.0
    %411 = vmatpush2.xpose.msra.mxu0 0.0
    %412 = vmatprep.subr.mxu0 0.0
    %413 = vmatpush2.xpose.msra.mxu0 0.0
    %414 = vmatprep.subr.mxu0 0.0
    %415 = vmatpush2.xpose.msra.mxu0 0.0
    %416 = vmatprep.subr.mxu0 0.0
    %417 = vmatpush2.xpose.msra.mxu0 0.0
    %418 = vmatprep.subr.mxu0 0.0
    %419 = vmatpush2.xpose.msra.mxu0 0.0
    %420 = vmatprep.subr.mxu0 0.0
    %421 = vmatpush2.xpose.msra.mxu0 0.0
    %422 = vmatprep.subr.mxu0 0.0
    %423 = vmatpush2.xpose.msra.mxu0 0.0
    %424 = vmatprep.subr.mxu0 0.0
    %425 = vmatpush2.xpose.msra.mxu0 0.0
    %426 = vmatprep.subr.mxu0 0.0
    %427 = vmatpush2.xpose.msra.mxu0 0.0
    %428 = vmatprep.subr.mxu0 0.0
    %429 = vmatpush2.xpose.msra.mxu0 0.0
    %430 = vmatprep.subr.mxu0 0.0
    %431 = vmatpush2.xpose.msra.mxu0 0.0
    %432 = vmatprep.subr.mxu0 0.0
    %433 = vmatpush2.xpose.msra.mxu0 0.0
    %434 = vmatprep.subr.mxu0 0.0
    %435 = vmatpush2.xpose.msra.mxu0 0.0
    %436 = vmatprep.subr.mxu0 0.0
    %437 = vmatpush2.xpose.msra.mxu0 0.0
    %438 = vmatprep.subr.mxu0 0.0
    %439 = vmatpush2.xpose.msra.mxu0 0.0
    %440 = vmatprep.subr.mxu0 0.0
    %441 = vmatpush2.xpose.msra.mxu0 0.0
    %442 = vmatprep.mubr.f32.mxu0 0.0
    %443 = vmatmul.mubr.f32.gmra.mxu0 %v374
    %v444 = vpop.f32.mrf.mxu0
    %v445 = vadd.f32 0.0, %v444
    %v446 = vpop.f32.mrf.mxu0
    %447 = vdwg.mxu0
    %v448 = vmul.f32 %v445, 0.35355338
    %v449 = vsel %vm206, %v448, -inf
    %450 = vmax.xlane.f32.xlu0 %v449
    %v451 = vpop.xlane.xlu0 %450
    %v452 = vsub.f32 %v448, %v451
    %v453 = vmul.f32 %v452, 1.442695
    %v454 = vpow.pop %v453
    %v455 = vsel %vm206, %v454, 0.0
    %456 = vadd.xlane.f32.xlu0 %v455
    %v457 = vpop.xlane.xlu0 %456
    %v458 = vrcp.pop %v457
    %v459 = vmul.f32 %v454, %v458
    %460 = vrot.lane.b32.xlu0 %v200, 56
    %v461 = vpop.permute.xlu0 %460
    %v464 = vsel %vm206, %v459, 0
    %466 = vmatprep.subr.mxu0 0.0
    %467 = vmatpush1.msra.mxu0 0.0
    %468 = vmatprep.subr.mxu0 0.0
    %469 = vmatpush1.msra.mxu0 0.0
    %470 = vmatprep.subr.mxu0 0.0
    %471 = vmatpush1.msra.mxu0 0.0
    %472 = vmatprep.subr.mxu0 0.0
    %473 = vmatpush1.msra.mxu0 0.0
    %474 = vmatprep.subr.mxu0 0.0
    %475 = vmatpush1.msra.mxu0 0.0
    %476 = vmatprep.subr.mxu0 0.0
    %477 = vmatpush1.msra.mxu0 0.0
    %478 = vmatprep.subr.mxu0 0.0
    %479 = vmatpush1.msra.mxu0 0.0
    %480 = vmatprep.subr.mxu0 0.0
    %481 = vmatpush1.msra.mxu0 0.0
    %482 = vmatprep.subr.mxu0 0.0
    %483 = vmatpush1.msra.mxu0 0.0
    %484 = vmatprep.subr.mxu0 0.0
    %485 = vmatpush1.msra.mxu0 0.0
    %486 = vmatprep.subr.mxu0 0.0
    %487 = vmatpush1.msra.mxu0 0.0
    %488 = vmatprep.subr.mxu0 0.0
    %489 = vmatpush1.msra.mxu0 0.0
    %490 = vmatprep.subr.mxu0 0.0
    %491 = vmatpush1.msra.mxu0 0.0
    %492 = vmatprep.subr.mxu0 0.0
    %493 = vmatpush1.msra.mxu0 0.0
    %494 = vmatprep.subr.mxu0 0.0
    %495 = vmatpush1.msra.mxu0 0.0
    %496 = vmatprep.subr.mxu0 0.0
    %497 = vmatpush1.msra.mxu0 %v461
    %498 = vmatprep.subr.mxu0 0.0
    %499 = vmatpush2.msra.mxu0 0.0
    %500 = vmatprep.subr.mxu0 0.0
    %501 = vmatpush2.msra.mxu0 0.0
    %502 = vmatprep.subr.mxu0 0.0
    %503 = vmatpush2.msra.mxu0 0.0
    %504 = vmatprep.subr.mxu0 0.0
    %505 = vmatpush2.msra.mxu0 0.0
    %506 = vmatprep.subr.mxu0 0.0
    %507 = vmatpush2.msra.mxu0 0.0
    %508 = vmatprep.subr.mxu0 0.0
    %509 = vmatpush2.msra.mxu0 0.0
    %510 = vmatprep.subr.mxu0 0.0
    %511 = vmatpush2.msra.mxu0 0.0
    %512 = vmatprep.subr.mxu0 0.0
    %513 = vmatpush2.msra.mxu0 0.0
    %514 = vmatprep.subr.mxu0 0.0
    %515 = vmatpush2.msra.mxu0 0.0
    %516 = vmatprep.subr.mxu0 0.0
    %517 = vmatpush2.msra.mxu0 0.0
    %518 = vmatprep.subr.mxu0 0.0
    %519 = vmatpush2.msra.mxu0 0.0
    %520 = vmatprep.subr.mxu0 0.0
    %521 = vmatpush2.msra.mxu0 0.0
    %522 = vmatprep.subr.mxu0 0.0
    %523 = vmatpush2.msra.mxu0 0.0
    %524 = vmatprep.subr.mxu0 0.0
    %525 = vmatpush2.msra.mxu0 0.0
    %526 = vmatprep.subr.mxu0 0.0
    %527 = vmatpush2.msra.mxu0 0.0
    %528 = vmatprep.subr.mxu0 0.0
    %529 = vmatpush2.msra.mxu0 0.0
    %530 = vmatprep.mubr.f32.mxu0 0.0
    %531 = vmatmul.mubr.f32.gmra.mxu0 %v464
    %v532 = vpop.f32.mrf.mxu0
    %v533 = vadd.f32 0.0, %v532
    %v534 = vpop.f32.mrf.mxu0
    %535 = vdwg.mxu0
    %537 = vrot.lane.b32.xlu0 %v533, 8
    %v538 = vpop.permute.xlu0 %537
    %vm540 = vcmask 130112
    %541 = vst.msk [vmem:[#allocation2] sm:$0xff] %vm540, %v538
    %542 = vrot.lane.b32.xlu0 %v200, 112
    %v543 = vpop.permute.xlu0 %542
    %544 = vrot.lane.b32.xlu0 %v200, 80
    %v545 = vpop.permute.xlu0 %544
    %v546 = vsel %vm206, %v543, 0
    %v548 = vsel %vm206, %v545, 0
    %550 = vmatprep.subr.mxu0 0.0
    %551 = vmatpush1.xpose.msra.mxu0 0.0
    %552 = vmatprep.subr.mxu0 0.0
    %553 = vmatpush1.xpose.msra.mxu0 0.0
    %554 = vmatprep.subr.mxu0 0.0
    %555 = vmatpush1.xpose.msra.mxu0 0.0
    %556 = vmatprep.subr.mxu0 0.0
    %557 = vmatpush1.xpose.msra.mxu0 0.0
    %558 = vmatprep.subr.mxu0 0.0
    %559 = vmatpush1.xpose.msra.mxu0 0.0
    %560 = vmatprep.subr.mxu0 0.0
    %561 = vmatpush1.xpose.msra.mxu0 0.0
    %562 = vmatprep.subr.mxu0 0.0
    %563 = vmatpush1.xpose.msra.mxu0 0.0
    %564 = vmatprep.subr.mxu0 0.0
    %565 = vmatpush1.xpose.msra.mxu0 0.0
    %566 = vmatprep.subr.mxu0 0.0
    %567 = vmatpush1.xpose.msra.mxu0 0.0
    %568 = vmatprep.subr.mxu0 0.0
    %569 = vmatpush1.xpose.msra.mxu0 0.0
    %570 = vmatprep.subr.mxu0 0.0
    %571 = vmatpush1.xpose.msra.mxu0 0.0
    %572 = vmatprep.subr.mxu0 0.0
    %573 = vmatpush1.xpose.msra.mxu0 0.0
    %574 = vmatprep.subr.mxu0 0.0
    %575 = vmatpush1.xpose.msra.mxu0 0.0
    %576 = vmatprep.subr.mxu0 0.0
    %577 = vmatpush1.xpose.msra.mxu0 0.0
    %578 = vmatprep.subr.mxu0 0.0
    %579 = vmatpush1.xpose.msra.mxu0 0.0
    %580 = vmatprep.subr.mxu0 0.0
    %581 = vmatpush1.xpose.msra.mxu0 %v548
    %582 = vmatprep.subr.mxu0 0.0
    %583 = vmatpush2.xpose.msra.mxu0 0.0
    %584 = vmatprep.subr.mxu0 0.0
    %585 = vmatpush2.xpose.msra.mxu0 0.0
    %586 = vmatprep.subr.mxu0 0.0
    %587 = vmatpush2.xpose.msra.mxu0 0.0
    %588 = vmatprep.subr.mxu0 0.0
    %589 = vmatpush2.xpose.msra.mxu0 0.0
    %590 = vmatprep.subr.mxu0 0.0
    %591 = vmatpush2.xpose.msra.mxu0 0.0
    %592 = vmatprep.subr.mxu0 0.0
    %593 = vmatpush2.xpose.msra.mxu0 0.0
    %594 = vmatprep.subr.mxu0 0.0
    %595 = vmatpush2.xpose.msra.mxu0 0.0
    %596 = vmatprep.subr.mxu0 0.0
    %597 = vmatpush2.xpose.msra.mxu0 0.0
    %598 = vmatprep.subr.mxu0 0.0
    %599 = vmatpush2.xpose.msra.mxu0 0.0
    %600 = vmatprep.subr.mxu0 0.0
    %601 = vmatpush2.xpose.msra.mxu0 0.0
    %602 = vmatprep.subr.mxu0 0.0
    %603 = vmatpush2.xpose.msra.mxu0 0.0
    %604 = vmatprep.subr.mxu0 0.0
    %605 = vmatpush2.xpose.msra.mxu0 0.0
    %606 = vmatprep.subr.mxu0 0.0
    %607 = vmatpush2.xpose.msra.mxu0 0.0
    %608 = vmatprep.subr.mxu0 0.0
    %609 = vmatpush2.xpose.msra.mxu0 0.0
    %610 = vmatprep.subr.mxu0 0.0
    %611 = vmatpush2.xpose.msra.mxu0 0.0
    %612 = vmatprep.subr.mxu0 0.0
    %613 = vmatpush2.xpose.msra.mxu0 0.0
    %614 = vmatprep.mubr.f32.mxu0 0.0
    %615 = vmatmul.mubr.f32.gmra.mxu0 %v546
    %v616 = vpop.f32.mrf.mxu0
    %v617 = vadd.f32 0.0, %v616
    %v618 = vpop.f32.mrf.mxu0
    %619 = vdwg.mxu0
    %v620 = vmul.f32 %v617, 0.35355338
    %v621 = vsel %vm206, %v620, -inf
    %622 = vmax.xlane.f32.xlu0 %v621
    %v623 = vpop.xlane.xlu0 %622
    %v624 = vsub.f32 %v620, %v623
    %v625 = vmul.f32 %v624, 1.442695
    %v626 = vpow.pop %v625
    %v627 = vsel %vm206, %v626, 0.0
    %628 = vadd.xlane.f32.xlu0 %v627
    %v629 = vpop.xlane.xlu0 %628
    %v630 = vrcp.pop %v629
    %v631 = vmul.f32 %v626, %v630
    %632 = vrot.lane.b32.xlu0 %v200, 48
    %v633 = vpop.permute.xlu0 %632
    %v636 = vsel %vm206, %v631, 0
    %638 = vmatprep.subr.mxu0 0.0
    %639 = vmatpush1.msra.mxu0 0.0
    %640 = vmatprep.subr.mxu0 0.0
    %641 = vmatpush1.msra.mxu0 0.0
    %642 = vmatprep.subr.mxu0 0.0
    %643 = vmatpush1.msra.mxu0 0.0
    %644 = vmatprep.subr.mxu0 0.0
    %645 = vmatpush1.msra.mxu0 0.0
    %646 = vmatprep.subr.mxu0 0.0
    %647 = vmatpush1.msra.mxu0 0.0
    %648 = vmatprep.subr.mxu0 0.0
    %649 = vmatpush1.msra.mxu0 0.0
    %650 = vmatprep.subr.mxu0 0.0
    %651 = vmatpush1.msra.mxu0 0.0
    %652 = vmatprep.subr.mxu0 0.0
    %653 = vmatpush1.msra.mxu0 0.0
    %654 = vmatprep.subr.mxu0 0.0
    %655 = vmatpush1.msra.mxu0 0.0
    %656 = vmatprep.subr.mxu0 0.0
    %657 = vmatpush1.msra.mxu0 0.0
    %658 = vmatprep.subr.mxu0 0.0
    %659 = vmatpush1.msra.mxu0 0.0
    %660 = vmatprep.subr.mxu0 0.0
    %661 = vmatpush1.msra.mxu0 0.0
    %662 = vmatprep.subr.mxu0 0.0
    %663 = vmatpush1.msra.mxu0 0.0
    %664 = vmatprep.subr.mxu0 0.0
    %665 = vmatpush1.msra.mxu0 0.0
    %666 = vmatprep.subr.mxu0 0.0
    %667 = vmatpush1.msra.mxu0 0.0
    %668 = vmatprep.subr.mxu0 0.0
    %669 = vmatpush1.msra.mxu0 %v633
    %670 = vmatprep.subr.mxu0 0.0
    %671 = vmatpush2.msra.mxu0 0.0
    %672 = vmatprep.subr.mxu0 0.0
    %673 = vmatpush2.msra.mxu0 0.0
    %674 = vmatprep.subr.mxu0 0.0
    %675 = vmatpush2.msra.mxu0 0.0
    %676 = vmatprep.subr.mxu0 0.0
    %677 = vmatpush2.msra.mxu0 0.0
    %678 = vmatprep.subr.mxu0 0.0
    %679 = vmatpush2.msra.mxu0 0.0
    %680 = vmatprep.subr.mxu0 0.0
    %681 = vmatpush2.msra.mxu0 0.0
    %682 = vmatprep.subr.mxu0 0.0
    %683 = vmatpush2.msra.mxu0 0.0
    %684 = vmatprep.subr.mxu0 0.0
    %685 = vmatpush2.msra.mxu0 0.0
    %686 = vmatprep.subr.mxu0 0.0
    %687 = vmatpush2.msra.mxu0 0.0
    %688 = vmatprep.subr.mxu0 0.0
    %689 = vmatpush2.msra.mxu0 0.0
    %690 = vmatprep.subr.mxu0 0.0
    %691 = vmatpush2.msra.mxu0 0.0
    %692 = vmatprep.subr.mxu0 0.0
    %693 = vmatpush2.msra.mxu0 0.0
    %694 = vmatprep.subr.mxu0 0.0
    %695 = vmatpush2.msra.mxu0 0.0
    %696 = vmatprep.subr.mxu0 0.0
    %697 = vmatpush2.msra.mxu0 0.0
    %698 = vmatprep.subr.mxu0 0.0
    %699 = vmatpush2.msra.mxu0 0.0
    %700 = vmatprep.subr.mxu0 0.0
    %701 = vmatpush2.msra.mxu0 0.0
    %702 = vmatprep.mubr.f32.mxu0 0.0
    %703 = vmatmul.mubr.f32.gmra.mxu0 %v636
    %v704 = vpop.f32.mrf.mxu0
    %v705 = vadd.f32 0.0, %v704
    %v706 = vpop.f32.mrf.mxu0
    %707 = vdwg.mxu0
    %709 = vrot.lane.b32.xlu0 %v705, 16
    %v710 = vpop.permute.xlu0 %709
    %vm712 = vcmask 195712
    %713 = vst.msk [vmem:[#allocation2] sm:$0xff] %vm712, %v710
    %714 = vrot.lane.b32.xlu0 %v200, 104
    %v715 = vpop.permute.xlu0 %714
    %716 = vrot.lane.b32.xlu0 %v200, 72
    %v717 = vpop.permute.xlu0 %716
    %v718 = vsel %vm206, %v715, 0
    %v720 = vsel %vm206, %v717, 0
    %722 = vmatprep.subr.mxu0 0.0
    %723 = vmatpush1.xpose.msra.mxu0 0.0
    %724 = vmatprep.subr.mxu0 0.0
    %725 = vmatpush1.xpose.msra.mxu0 0.0
    %726 = vmatprep.subr.mxu0 0.0
    %727 = vmatpush1.xpose.msra.mxu0 0.0
    %728 = vmatprep.subr.mxu0 0.0
    %729 = vmatpush1.xpose.msra.mxu0 0.0
    %730 = vmatprep.subr.mxu0 0.0
    %731 = vmatpush1.xpose.msra.mxu0 0.0
    %732 = vmatprep.subr.mxu0 0.0
    %733 = vmatpush1.xpose.msra.mxu0 0.0
    %734 = vmatprep.subr.mxu0 0.0
    %735 = vmatpush1.xpose.msra.mxu0 0.0
    %736 = vmatprep.subr.mxu0 0.0
    %737 = vmatpush1.xpose.msra.mxu0 0.0
    %738 = vmatprep.subr.mxu0 0.0
    %739 = vmatpush1.xpose.msra.mxu0 0.0
    %740 = vmatprep.subr.mxu0 0.0
    %741 = vmatpush1.xpose.msra.mxu0 0.0
    %742 = vmatprep.subr.mxu0 0.0
    %743 = vmatpush1.xpose.msra.mxu0 0.0
    %744 = vmatprep.subr.mxu0 0.0
    %745 = vmatpush1.xpose.msra.mxu0 0.0
    %746 = vmatprep.subr.mxu0 0.0
    %747 = vmatpush1.xpose.msra.mxu0 0.0
    %748 = vmatprep.subr.mxu0 0.0
    %749 = vmatpush1.xpose.msra.mxu0 0.0
    %750 = vmatprep.subr.mxu0 0.0
    %751 = vmatpush1.xpose.msra.mxu0 0.0
    %752 = vmatprep.subr.mxu0 0.0
    %753 = vmatpush1.xpose.msra.mxu0 %v720
    %754 = vmatprep.subr.mxu0 0.0
    %755 = vmatpush2.xpose.msra.mxu0 0.0
    %756 = vmatprep.subr.mxu0 0.0
    %757 = vmatpush2.xpose.msra.mxu0 0.0
    %758 = vmatprep.subr.mxu0 0.0
    %759 = vmatpush2.xpose.msra.mxu0 0.0
    %760 = vmatprep.subr.mxu0 0.0
    %761 = vmatpush2.xpose.msra.mxu0 0.0
    %762 = vmatprep.subr.mxu0 0.0
    %763 = vmatpush2.xpose.msra.mxu0 0.0
    %764 = vmatprep.subr.mxu0 0.0
    %765 = vmatpush2.xpose.msra.mxu0 0.0
    %766 = vmatprep.subr.mxu0 0.0
    %767 = vmatpush2.xpose.msra.mxu0 0.0
    %768 = vmatprep.subr.mxu0 0.0
    %769 = vmatpush2.xpose.msra.mxu0 0.0
    %770 = vmatprep.subr.mxu0 0.0
    %771 = vmatpush2.xpose.msra.mxu0 0.0
    %772 = vmatprep.subr.mxu0 0.0
    %773 = vmatpush2.xpose.msra.mxu0 0.0
    %774 = vmatprep.subr.mxu0 0.0
    %775 = vmatpush2.xpose.msra.mxu0 0.0
    %776 = vmatprep.subr.mxu0 0.0
    %777 = vmatpush2.xpose.msra.mxu0 0.0
    %778 = vmatprep.subr.mxu0 0.0
    %779 = vmatpush2.xpose.msra.mxu0 0.0
    %780 = vmatprep.subr.mxu0 0.0
    %781 = vmatpush2.xpose.msra.mxu0 0.0
    %782 = vmatprep.subr.mxu0 0.0
    %783 = vmatpush2.xpose.msra.mxu0 0.0
    %784 = vmatprep.subr.mxu0 0.0
    %785 = vmatpush2.xpose.msra.mxu0 0.0
    %786 = vmatprep.mubr.f32.mxu0 0.0
    %787 = vmatmul.mubr.f32.gmra.mxu0 %v718
    %v788 = vpop.f32.mrf.mxu0
    %v789 = vadd.f32 0.0, %v788
    %v790 = vpop.f32.mrf.mxu0
    %791 = vdwg.mxu0
    %v792 = vmul.f32 %v789, 0.35355338
    %v793 = vsel %vm206, %v792, -inf
    %794 = vmax.xlane.f32.xlu0 %v793
    %v795 = vpop.xlane.xlu0 %794
    %v796 = vsub.f32 %v792, %v795
    %v797 = vmul.f32 %v796, 1.442695
    %v798 = vpow.pop %v797
    %v799 = vsel %vm206, %v798, 0.0
    %800 = vadd.xlane.f32.xlu0 %v799
    %v801 = vpop.xlane.xlu0 %800
    %v802 = vrcp.pop %v801
    %v803 = vmul.f32 %v798, %v802
    %804 = vrot.lane.b32.xlu0 %v200, 40
    %v805 = vpop.permute.xlu0 %804
    %v808 = vsel %vm206, %v803, 0
    %810 = vmatprep.subr.mxu0 0.0
    %811 = vmatpush1.msra.mxu0 0.0
    %812 = vmatprep.subr.mxu0 0.0
    %813 = vmatpush1.msra.mxu0 0.0
    %814 = vmatprep.subr.mxu0 0.0
    %815 = vmatpush1.msra.mxu0 0.0
    %816 = vmatprep.subr.mxu0 0.0
    %817 = vmatpush1.msra.mxu0 0.0
    %818 = vmatprep.subr.mxu0 0.0
    %819 = vmatpush1.msra.mxu0 0.0
    %820 = vmatprep.subr.mxu0 0.0
    %821 = vmatpush1.msra.mxu0 0.0
    %822 = vmatprep.subr.mxu0 0.0
    %823 = vmatpush1.msra.mxu0 0.0
    %824 = vmatprep.subr.mxu0 0.0
    %825 = vmatpush1.msra.mxu0 0.0
    %826 = vmatprep.subr.mxu0 0.0
    %827 = vmatpush1.msra.mxu0 0.0
    %828 = vmatprep.subr.mxu0 0.0
    %829 = vmatpush1.msra.mxu0 0.0
    %830 = vmatprep.subr.mxu0 0.0
    %831 = vmatpush1.msra.mxu0 0.0
    %832 = vmatprep.subr.mxu0 0.0
    %833 = vmatpush1.msra.mxu0 0.0
    %834 = vmatprep.subr.mxu0 0.0
    %835 = vmatpush1.msra.mxu0 0.0
    %836 = vmatprep.subr.mxu0 0.0
    %837 = vmatpush1.msra.mxu0 0.0
    %838 = vmatprep.subr.mxu0 0.0
    %839 = vmatpush1.msra.mxu0 0.0
    %840 = vmatprep.subr.mxu0 0.0
    %841 = vmatpush1.msra.mxu0 %v805
    %842 = vmatprep.subr.mxu0 0.0
    %843 = vmatpush2.msra.mxu0 0.0
    %844 = vmatprep.subr.mxu0 0.0
    %845 = vmatpush2.msra.mxu0 0.0
    %846 = vmatprep.subr.mxu0 0.0
    %847 = vmatpush2.msra.mxu0 0.0
    %848 = vmatprep.subr.mxu0 0.0
    %849 = vmatpush2.msra.mxu0 0.0
    %850 = vmatprep.subr.mxu0 0.0
    %851 = vmatpush2.msra.mxu0 0.0
    %852 = vmatprep.subr.mxu0 0.0
    %853 = vmatpush2.msra.mxu0 0.0
    %854 = vmatprep.subr.mxu0 0.0
    %855 = vmatpush2.msra.mxu0 0.0
    %856 = vmatprep.subr.mxu0 0.0
    %857 = vmatpush2.msra.mxu0 0.0
    %858 = vmatprep.subr.mxu0 0.0
    %859 = vmatpush2.msra.mxu0 0.0
    %860 = vmatprep.subr.mxu0 0.0
    %861 = vmatpush2.msra.mxu0 0.0
    %862 = vmatprep.subr.mxu0 0.0
    %863 = vmatpush2.msra.mxu0 0.0
    %864 = vmatprep.subr.mxu0 0.0
    %865 = vmatpush2.msra.mxu0 0.0
    %866 = vmatprep.subr.mxu0 0.0
    %867 = vmatpush2.msra.mxu0 0.0
    %868 = vmatprep.subr.mxu0 0.0
    %869 = vmatpush2.msra.mxu0 0.0
    %870 = vmatprep.subr.mxu0 0.0
    %871 = vmatpush2.msra.mxu0 0.0
    %872 = vmatprep.subr.mxu0 0.0
    %873 = vmatpush2.msra.mxu0 0.0
    %874 = vmatprep.mubr.f32.mxu0 0.0
    %875 = vmatmul.mubr.f32.gmra.mxu0 %v808
    %v876 = vpop.f32.mrf.mxu0
    %v877 = vadd.f32 0.0, %v876
    %v878 = vpop.f32.mrf.mxu0
    %879 = vdwg.mxu0
    %881 = vrot.lane.b32.xlu0 %v877, 24
    %v882 = vpop.permute.xlu0 %881
    %vm884 = vcmask 261312
    %885 = vst.msk [vmem:[#allocation2] sm:$0xff] %vm884, %v882
    %v886 = vld [vmem:[#allocation2] sm:$0xff]
    %v887 = vld [vmem:[#allocation6 + $0x40] sm:$0xff]
    %v888 = vld [vmem:[#allocation6 + $0x48] sm:$0xff]
    %v889 = vld [vmem:[#allocation6 + $0x50] sm:$0xff]
    %v890 = vld [vmem:[#allocation6 + $0x58] sm:$0xff]
    %v891 = vld [vmem:[#allocation6 + $0x60] sm:$0x1]
    %v892 = vlaneseq
    %v893 = vshrl.u32 %v892, 7
    %v894 = vsub.s32 0, %v893
    %v895 = vrot.slane %v891, %v894
    %v897 = vsel %vm129, %v886, 0
    %899 = vmatprep.subr.mxu0 0.0
    %900 = vmatpush1.msra.mxu0 0.0
    %901 = vmatprep.subr.mxu0 0.0
    %902 = vmatpush1.msra.mxu0 0.0
    %903 = vmatprep.subr.mxu0 0.0
    %904 = vmatpush1.msra.mxu0 0.0
    %905 = vmatprep.subr.mxu0 0.0
    %906 = vmatpush1.msra.mxu0 0.0
    %907 = vmatprep.subr.mxu0 0.0
    %908 = vmatpush1.msra.mxu0 0.0
    %909 = vmatprep.subr.mxu0 0.0
    %910 = vmatpush1.msra.mxu0 0.0
    %911 = vmatprep.subr.mxu0 0.0
    %912 = vmatpush1.msra.mxu0 0.0
    %913 = vmatprep.subr.mxu0 0.0
    %914 = vmatpush1.msra.mxu0 0.0
    %915 = vmatprep.subr.mxu0 0.0
    %916 = vmatpush1.msra.mxu0 0.0
    %917 = vmatprep.subr.mxu0 0.0
    %918 = vmatpush1.msra.mxu0 0.0
    %919 = vmatprep.subr.mxu0 0.0
    %920 = vmatpush1.msra.mxu0 0.0
    %921 = vmatprep.subr.mxu0 0.0
    %922 = vmatpush1.msra.mxu0 0.0
    %923 = vmatprep.subr.mxu0 0.0
    %924 = vmatpush1.msra.mxu0 %v890
    %925 = vmatprep.subr.mxu0 0.0
    %926 = vmatpush1.msra.mxu0 %v889
    %927 = vmatprep.subr.mxu0 0.0
    %928 = vmatpush1.msra.mxu0 %v888
    %929 = vmatprep.subr.mxu0 0.0
    %930 = vmatpush1.msra.mxu0 %v887
    %931 = vmatprep.subr.mxu0 0.0
    %932 = vmatpush2.msra.mxu0 0.0
    %933 = vmatprep.subr.mxu0 0.0
    %934 = vmatpush2.msra.mxu0 0.0
    %935 = vmatprep.subr.mxu0 0.0
    %936 = vmatpush2.msra.mxu0 0.0
    %937 = vmatprep.subr.mxu0 0.0
    %938 = vmatpush2.msra.mxu0 0.0
    %939 = vmatprep.subr.mxu0 0.0
    %940 = vmatpush2.msra.mxu0 0.0
    %941 = vmatprep.subr.mxu0 0.0
    %942 = vmatpush2.msra.mxu0 0.0
    %943 = vmatprep.subr.mxu0 0.0
    %944 = vmatpush2.msra.mxu0 0.0
    %945 = vmatprep.subr.mxu0 0.0
    %946 = vmatpush2.msra.mxu0 0.0
    %947 = vmatprep.subr.mxu0 0.0
    %948 = vmatpush2.msra.mxu0 0.0
    %949 = vmatprep.subr.mxu0 0.0
    %950 = vmatpush2.msra.mxu0 0.0
    %951 = vmatprep.subr.mxu0 0.0
    %952 = vmatpush2.msra.mxu0 0.0
    %953 = vmatprep.subr.mxu0 0.0
    %954 = vmatpush2.msra.mxu0 0.0
    %955 = vmatprep.subr.mxu0 0.0
    %956 = vmatpush2.msra.mxu0 0.0
    %957 = vmatprep.subr.mxu0 0.0
    %958 = vmatpush2.msra.mxu0 0.0
    %959 = vmatprep.subr.mxu0 0.0
    %960 = vmatpush2.msra.mxu0 0.0
    %961 = vmatprep.subr.mxu0 0.0
    %962 = vmatpush2.msra.mxu0 0.0
    %963 = vmatprep.mubr.f32.mxu0 0.0
    %964 = vmatmul.mubr.f32.gmra.mxu0 %v897
    %v965 = vpop.f32.mrf.mxu0
    %v966 = vadd.f32 %v895, %v965
    %v967 = vpop.f32.mrf.mxu0
    %968 = vdwg.mxu0
    %v969 = vadd.f32 %v117, %v966
    %v970 = vld [vmem:[#allocation6 + $0x68] sm:$0x1]
    %v971 = vld [vmem:[#allocation6 + $0x70] sm:$0x1]
    %v972 = vsel %vm129, %v969, 0.0
    %973 = vadd.xlane.f32.xlu0 %v972
    %v974 = vpop.xlane.xlu0 %973
    %v975 = vrcp.pop 32.0
    %v976 = vmul.f32 %v974, %v975
    %v977 = vsub.f32 %v969, %v976
    %v978 = vmul.f32 %v977, %v977
    %v979 = vsel %vm129, %v978, 0.0
    %980 = vadd.xlane.f32.xlu0 %v979
    %v981 = vpop.xlane.xlu0 %980
    %v982 = vmul.f32 %v981, %v975
    %v983 = vadd.f32 %v982, 1e-05
    %v984 = vrsqrt.pop %v983
    %v985 = vmul.f32 %v977, %v984
    %v986 = vlaneseq
    %v987 = vshrl.u32 %v986, 7
    %v988 = vsub.s32 0, %v987
    %v989 = vrot.slane %v970, %v988
    %v990 = vmul.f32 %v985, %v989
    %v991 = vlaneseq
    %v992 = vshrl.u32 %v991, 7
    %v993 = vsub.s32 0, %v992
    %v994 = vrot.slane %v971, %v993
    %v995 = vadd.f32 %v990, %v994
    %v996 = vld [vmem:[#allocation6 + $0x78] sm:$0xff]
    %v997 = vld [vmem:[#allocation6 + $0x80] sm:$0xff]
    %v998 = vld [vmem:[#allocation6 + $0x88] sm:$0xff]
    %v999 = vld [vmem:[#allocation6 + $0x90] sm:$0xff]
    %v1000 = vld [vmem:[#allocation6 + $0x98] sm:$0x1]
    %v1001 = vlaneseq
    %v1002 = vshrl.u32 %v1001, 7
    %v1003 = vsub.s32 0, %v1002
    %v1004 = vrot.slane %v1000, %v1003
    %v1006 = vsel %vm129, %v995, 0
    %1008 = vmatprep.subr.mxu0 0.0
    %1009 = vmatpush1.msra.mxu0 0.0
    %1010 = vmatprep.subr.mxu0 0.0
    %1011 = vmatpush1.msra.mxu0 0.0
    %1012 = vmatprep.subr.mxu0 0.0
    %1013 = vmatpush1.msra.mxu0 0.0
    %1014 = vmatprep.subr.mxu0 0.0
    %1015 = vmatpush1.msra.mxu0 0.0
    %1016 = vmatprep.subr.mxu0 0.0
    %1017 = vmatpush1.msra.mxu0 0.0
    %1018 = vmatprep.subr.mxu0 0.0
    %1019 = vmatpush1.msra.mxu0 0.0
    %1020 = vmatprep.subr.mxu0 0.0
    %1021 = vmatpush1.msra.mxu0 0.0
    %1022 = vmatprep.subr.mxu0 0.0
    %1023 = vmatpush1.msra.mxu0 0.0
    %1024 = vmatprep.subr.mxu0 0.0
    %1025 = vmatpush1.msra.mxu0 0.0
    %1026 = vmatprep.subr.mxu0 0.0
    %1027 = vmatpush1.msra.mxu0 0.0
    %1028 = vmatprep.subr.mxu0 0.0
    %1029 = vmatpush1.msra.mxu0 0.0
    %1030 = vmatprep.subr.mxu0 0.0
    %1031 = vmatpush1.msra.mxu0 0.0
    %1032 = vmatprep.subr.mxu0 0.0
    %1033 = vmatpush1.msra.mxu0 %v999
    %1034 = vmatprep.subr.mxu0 0.0
    %1035 = vmatpush1.msra.mxu0 %v998
    %1036 = vmatprep.subr.mxu0 0.0
    %1037 = vmatpush1.msra.mxu0 %v997
    %1038 = vmatprep.subr.mxu0 0.0
    %1039 = vmatpush1.msra.mxu0 %v996
    %1040 = vmatprep.subr.mxu0 0.0
    %1041 = vmatpush2.msra.mxu0 0.0
    %1042 = vmatprep.subr.mxu0 0.0
    %1043 = vmatpush2.msra.mxu0 0.0
    %1044 = vmatprep.subr.mxu0 0.0
    %1045 = vmatpush2.msra.mxu0 0.0
    %1046 = vmatprep.subr.mxu0 0.0
    %1047 = vmatpush2.msra.mxu0 0.0
    %1048 = vmatprep.subr.mxu0 0.0
    %1049 = vmatpush2.msra.mxu0 0.0
    %1050 = vmatprep.subr.mxu0 0.0
    %1051 = vmatpush2.msra.mxu0 0.0
    %1052 = vmatprep.subr.mxu0 0.0
    %1053 = vmatpush2.msra.mxu0 0.0
    %1054 = vmatprep.subr.mxu0 0.0
    %1055 = vmatpush2.msra.mxu0 0.0
    %1056 = vmatprep.subr.mxu0 0.0
    %1057 = vmatpush2.msra.mxu0 0.0
    %1058 = vmatprep.subr.mxu0 0.0
    %1059 = vmatpush2.msra.mxu0 0.0
    %1060 = vmatprep.subr.mxu0 0.0
    %1061 = vmatpush2.msra.mxu0 0.0
    %1062 = vmatprep.subr.mxu0 0.0
    %1063 = vmatpush2.msra.mxu0 0.0
    %1064 = vmatprep.subr.mxu0 0.0
    %1065 = vmatpush2.msra.mxu0 0.0
    %1066 = vmatprep.subr.mxu0 0.0
    %1067 = vmatpush2.msra.mxu0 0.0
    %1068 = vmatprep.subr.mxu0 0.0
    %1069 = vmatpush2.msra.mxu0 0.0
    %1070 = vmatprep.subr.mxu0 0.0
    %1071 = vmatpush2.msra.mxu0 0.0
    %1072 = vmatprep.mubr.f32.mxu0 0.0
    %1073 = vmatmul.mubr.f32.gmra.mxu0 %v1006
    %v1074 = vpop.f32.mrf.mxu0
    %v1075 = vadd.f32 %v1004, %v1074
    %v1076 = vpop.f32.mrf.mxu0
    %1077 = vdwg.mxu0
    %v1078 = vmax.f32 %v1075, 0.0
    %v1079 = vld [vmem:[#allocation6 + $0xa0] sm:$0xff]
    %v1080 = vld [vmem:[#allocation6 + $0xa8] sm:$0xff]
    %v1081 = vld [vmem:[#allocation6 + $0xb0] sm:$0xff]
    %v1082 = vld [vmem:[#allocation6 + $0xb8] sm:$0xff]
    %v1083 = vld [vmem:[#allocation6 + $0xc0] sm:$0xff]
    %v1084 = vld [vmem:[#allocation6 + $0xc8] sm:$0xff]
    %v1085 = vld [vmem:[#allocation6 + $0xd0] sm:$0xff]
    %v1086 = vld [vmem:[#allocation6 + $0xd8] sm:$0xff]
    %v1087 = vld [vmem:[#allocation6 + $0xe0] sm:$0x1]
    %v1088 = vlaneseq
    %v1089 = vshrl.u32 %v1088, 7
    %v1090 = vsub.s32 0, %v1089
    %v1091 = vrot.slane %v1087, %v1090
    %vm1092 = vcmask 523264
    %v1094 = vsel %vm1092, %v1078, 0
    %1096 = vmatprep.subr.mxu0 0.0
    %1097 = vmatpush1.msra.mxu0 0.0
    %1098 = vmatprep.subr.mxu0 0.0
    %1099 = vmatpush1.msra.mxu0 0.0
    %1100 = vmatprep.subr.mxu0 0.0
    %1101 = vmatpush1.msra.mxu0 0.0
    %1102 = vmatprep.subr.mxu0 0.0
    %1103 = vmatpush1.msra.mxu0 0.0
    %1104 = vmatprep.subr.mxu0 0.0
    %1105 = vmatpush1.msra.mxu0 0.0
    %1106 = vmatprep.subr.mxu0 0.0
    %1107 = vmatpush1.msra.mxu0 0.0
    %1108 = vmatprep.subr.mxu0 0.0
    %1109 = vmatpush1.msra.mxu0 0.0
    %1110 = vmatprep.subr.mxu0 0.0
    %1111 = vmatpush1.msra.mxu0 0.0
    %1112 = vmatprep.subr.mxu0 0.0
    %1113 = vmatpush1.msra.mxu0 %v1086
    %1114 = vmatprep.subr.mxu0 0.0
    %1115 = vmatpush1.msra.mxu0 %v1085
    %1116 = vmatprep.subr.mxu0 0.0
    %1117 = vmatpush1.msra.mxu0 %v1084
    %1118 = vmatprep.subr.mxu0 0.0
    %1119 = vmatpush1.msra.mxu0 %v1083
    %1120 = vmatprep.subr.mxu0 0.0
    %1121 = vmatpush1.msra.mxu0 %v1082
    %1122 = vmatprep.subr.mxu0 0.0
    %1123 = vmatpush1.msra.mxu0 %v1081
    %1124 = vmatprep.subr.mxu0 0.0
    %1125 = vmatpush1.msra.mxu0 %v1080
    %1126 = vmatprep.subr.mxu0 0.0
    %1127 = vmatpush1.msra.mxu0 %v1079
    %1128 = vmatprep.subr.mxu0 0.0
    %1129 = vmatpush2.msra.mxu0 0.0
    %1130 = vmatprep.subr.mxu0 0.0
    %1131 = vmatpush2.msra.mxu0 0.0
    %1132 = vmatprep.subr.mxu0 0.0
    %1133 = vmatpush2.msra.mxu0 0.0
    %1134 = vmatprep.subr.mxu0 0.0
    %1135 = vmatpush2.msra.mxu0 0.0
    %1136 = vmatprep.subr.mxu0 0.0
    %1137 = vmatpush2.msra.mxu0 0.0
    %1138 = vmatprep.subr.mxu0 0.0
    %1139 = vmatpush2.msra.mxu0 0.0
    %1140 = vmatprep.subr.mxu0 0.0
    %1141 = vmatpush2.msra.mxu0 0.0
    %1142 = vmatprep.subr.mxu0 0.0
    %1143 = vmatpush2.msra.mxu0 0.0
    %1144 = vmatprep.subr.mxu0 0.0
    %1145 = vmatpush2.msra.mxu0 0.0
    %1146 = vmatprep.subr.mxu0 0.0
    %1147 = vmatpush2.msra.mxu0 0.0
    %1148 = vmatprep.subr.mxu0 0.0
    %1149 = vmatpush2.msra.mxu0 0.0
    %1150 = vmatprep.subr.mxu0 0.0
    %1151 = vmatpush2.msra.mxu0 0.0
    %1152 = vmatprep.subr.mxu0 0.0
    %1153 = vmatpush2.msra.mxu0 0.0
    %1154 = vmatprep.subr.mxu0 0.0
    %1155 = vmatpush2.msra.mxu0 0.0
    %1156 = vmatprep.subr.mxu0 0.0
    %1157 = vmatpush2.msra.mxu0 0.0
    %1158 = vmatprep.subr.mxu0 0.0
    %1159 = vmatpush2.msra.mxu0 0.0
    %1160 = vmatprep.mubr.f32.mxu0 0.0
    %1161 = vmatmul.mubr.f32.gmra.mxu0 %v1094
    %v1162 = vpop.f32.mrf.mxu0
    %v1163 = vadd.f32 %v1091, %v1162
    %v1164 = vpop.f32.mrf.mxu0
    %1165 = vdwg.mxu0
    %v1166 = vadd.f32 %v995, %v1163
    %v1167 = vld [vmem:[#allocation6 + $0xe8] sm:$0x1]
    %v1168 = vld [vmem:[#allocation6 + $0xf0] sm:$0x1]
    %v1169 = vsel %vm129, %v1166, 0.0
    %1170 = vadd.xlane.f32.xlu0 %v1169
    %v1171 = vpop.xlane.xlu0 %1170
    %v1172 = vmul.f32 %v1171, %v975
    %v1173 = vsub.f32 %v1166, %v1172
    %v1174 = vmul.f32 %v1173, %v1173
    %v1175 = vsel %vm129, %v1174, 0.0
    %1176 = vadd.xlane.f32.xlu0 %v1175
    %v1177 = vpop.xlane.xlu0 %1176
    %v1178 = vmul.f32 %v1177, %v975
    %v1179 = vadd.f32 %v1178, 1e-05
    %v1180 = vrsqrt.pop %v1179
    %v1181 = vmul.f32 %v1173, %v1180
    %v1182 = vlaneseq
    %v1183 = vshrl.u32 %v1182, 7
    %v1184 = vsub.s32 0, %v1183
    %v1185 = vrot.slane %v1167, %v1184
    %v1186 = vmul.f32 %v1181, %v1185
    %v1187 = vlaneseq
    %v1188 = vshrl.u32 %v1187, 7
    %v1189 = vsub.s32 0, %v1188
    %v1190 = vrot.slane %v1168, %v1189
    %v1191 = vadd.f32 %v1186, %v1190
    %v1192 = vld [vmem:[#allocation6 + $0xf8] sm:$0xff]
    %v1193 = vld [vmem:[#allocation6 + $0x100] sm:$0xff]
    %v1194 = vld [vmem:[#allocation6 + $0x108] sm:$0xff]
    %v1195 = vld [vmem:[#allocation6 + $0x110] sm:$0xff]
    %v1196 = vld [vmem:[#allocation6 + $0x118] sm:$0x1]
    %v1197 = vlaneseq
    %v1198 = vshrl.u32 %v1197, 7
    %v1199 = vsub.s32 0, %v1198
    %v1200 = vrot.slane %v1196, %v1199
    %v1202 = vsel %vm129, %v1191, 0
    %1204 = vmatprep.subr.mxu0 0.0
    %1205 = vmatpush1.msra.mxu0 0.0
    %1206 = vmatprep.subr.mxu0 0.0
    %1207 = vmatpush1.msra.mxu0 0.0
    %1208 = vmatprep.subr.mxu0 0.0
    %1209 = vmatpush1.msra.mxu0 0.0
    %1210 = vmatprep.subr.mxu0 0.0
    %1211 = vmatpush1.msra.mxu0 0.0
    %1212 = vmatprep.subr.mxu0 0.0
    %1213 = vmatpush1.msra.mxu0 0.0
    %1214 = vmatprep.subr.mxu0 0.0
    %1215 = vmatpush1.msra.mxu0 0.0
    %1216 = vmatprep.subr.mxu0 0.0
    %1217 = vmatpush1.msra.mxu0 0.0
    %1218 = vmatprep.subr.mxu0 0.0
    %1219 = vmatpush1.msra.mxu0 0.0
    %1220 = vmatprep.subr.mxu0 0.0
    %1221 = vmatpush1.msra.mxu0 0.0
    %1222 = vmatprep.subr.mxu0 0.0
    %1223 = vmatpush1.msra.mxu0 0.0
    %1224 = vmatprep.subr.mxu0 0.0
    %1225 = vmatpush1.msra.mxu0 0.0
    %1226 = vmatprep.subr.mxu0 0.0
    %1227 = vmatpush1.msra.mxu0 0.0
    %1228 = vmatprep.subr.mxu0 0.0
    %1229 = vmatpush1.msra.mxu0 %v1195
    %1230 = vmatprep.subr.mxu0 0.0
    %1231 = vmatpush1.msra.mxu0 %v1194
    %1232 = vmatprep.subr.mxu0 0.0
    %1233 = vmatpush1.msra.mxu0 %v1193
    %1234 = vmatprep.subr.mxu0 0.0
    %1235 = vmatpush1.msra.mxu0 %v1192
    %1236 = vmatprep.subr.mxu0 0.0
    %1237 = vmatpush2.msra.mxu0 0.0
    %1238 = vmatprep.subr.mxu0 0.0
    %1239 = vmatpush2.msra.mxu0 0.0
    %1240 = vmatprep.subr.mxu0 0.0
    %1241 = vmatpush2.msra.mxu0 0.0
    %1242 = vmatprep.subr.mxu0 0.0
    %1243 = vmatpush2.msra.mxu0 0.0
    %1244 = vmatprep.subr.mxu0 0.0
    %1245 = vmatpush2.msra.mxu0 0.0
    %1246 = vmatprep.subr.mxu0 0.0
    %1247 = vmatpush2.msra.mxu0 0.0
    %1248 = vmatprep.subr.mxu0 0.0
    %1249 = vmatpush2.msra.mxu0 0.0
    %1250 = vmatprep.subr.mxu0 0.0
    %1251 = vmatpush2.msra.mxu0 0.0
    %1252 = vmatprep.subr.mxu0 0.0
    %1253 = vmatpush2.msra.mxu0 0.0
    %1254 = vmatprep.subr.mxu0 0.0
    %1255 = vmatpush2.msra.mxu0 0.0
    %1256 = vmatprep.subr.mxu0 0.0
    %1257 = vmatpush2.msra.mxu0 0.0
    %1258 = vmatprep.subr.mxu0 0.0
    %1259 = vmatpush2.msra.mxu0 0.0
    %1260 = vmatprep.subr.mxu0 0.0
    %1261 = vmatpush2.msra.mxu0 0.0
    %1262 = vmatprep.subr.mxu0 0.0
    %1263 = vmatpush2.msra.mxu0 0.0
    %1264 = vmatprep.subr.mxu0 0.0
    %1265 = vmatpush2.msra.mxu0 0.0
    %1266 = vmatprep.subr.mxu0 0.0
    %1267 = vmatpush2.msra.mxu0 0.0
    %1268 = vmatprep.mubr.f32.mxu0 0.0
    %1269 = vmatmul.mubr.f32.gmra.mxu0 %v1202
    %v1270 = vpop.f32.mrf.mxu0
    %v1271 = vadd.f32 %v1200, %v1270
    %v1272 = vpop.f32.mrf.mxu0
    %1273 = vdwg.mxu0
    %1275 = vrot.lane.b32.xlu0 %v1271, 96
    %v1276 = vpop.permute.xlu0 %1275
    %v1277 = vsel %vm206, %v1271, 0
    %v1279 = vsel %vm206, %v1276, 0
    %1281 = vmatprep.subr.mxu0 0.0
    %1282 = vmatpush1.xpose.msra.mxu0 0.0
    %1283 = vmatprep.subr.mxu0 0.0
    %1284 = vmatpush1.xpose.msra.mxu0 0.0
    %1285 = vmatprep.subr.mxu0 0.0
    %1286 = vmatpush1.xpose.msra.mxu0 0.0
    %1287 = vmatprep.subr.mxu0 0.0
    %1288 = vmatpush1.xpose.msra.mxu0 0.0
    %1289 = vmatprep.subr.mxu0 0.0
    %1290 = vmatpush1.xpose.msra.mxu0 0.0
    %1291 = vmatprep.subr.mxu0 0.0
    %1292 = vmatpush1.xpose.msra.mxu0 0.0
    %1293 = vmatprep.subr.mxu0 0.0
    %1294 = vmatpush1.xpose.msra.mxu0 0.0
    %1295 = vmatprep.subr.mxu0 0.0
    %1296 = vmatpush1.xpose.msra.mxu0 0.0
    %1297 = vmatprep.subr.mxu0 0.0
    %1298 = vmatpush1.xpose.msra.mxu0 0.0
    %1299 = vmatprep.subr.mxu0 0.0
    %1300 = vmatpush1.xpose.msra.mxu0 0.0
    %1301 = vmatprep.subr.mxu0 0.0
    %1302 = vmatpush1.xpose.msra.mxu0 0.0
    %1303 = vmatprep.subr.mxu0 0.0
    %1304 = vmatpush1.xpose.msra.mxu0 0.0
    %1305 = vmatprep.subr.mxu0 0.0
    %1306 = vmatpush1.xpose.msra.mxu0 0.0
    %1307 = vmatprep.subr.mxu0 0.0
    %1308 = vmatpush1.xpose.msra.mxu0 0.0
    %1309 = vmatprep.subr.mxu0 0.0
    %1310 = vmatpush1.xpose.msra.mxu0 0.0
    %1311 = vmatprep.subr.mxu0 0.0
    %1312 = vmatpush1.xpose.msra.mxu0 %v1279
    %1313 = vmatprep.subr.mxu0 0.0
    %1314 = vmatpush2.xpose.msra.mxu0 0.0
    %1315 = vmatprep.subr.mxu0 0.0
    %1316 = vmatpush2.xpose.msra.mxu0 0.0
    %1317 = vmatprep.subr.mxu0 0.0
    %1318 = vmatpush2.xpose.msra.mxu0 0.0
    %1319 = vmatprep.subr.mxu0 0.0
    %1320 = vmatpush2.xpose.msra.mxu0 0.0
    %1321 = vmatprep.subr.mxu0 0.0
    %1322 = vmatpush2.xpose.msra.mxu0 0.0
    %1323 = vmatprep.subr.mxu0 0.0
    %1324 = vmatpush2.xpose.msra.mxu0 0.0
    %1325 = vmatprep.subr.mxu0 0.0
    %1326 = vmatpush2.xpose.msra.mxu0 0.0
    %1327 = vmatprep.subr.mxu0 0.0
    %1328 = vmatpush2.xpose.msra.mxu0 0.0
    %1329 = vmatprep.subr.mxu0 0.0
    %1330 = vmatpush2.xpose.msra.mxu0 0.0
    %1331 = vmatprep.subr.mxu0 0.0
    %1332 = vmatpush2.xpose.msra.mxu0 0.0
    %1333 = vmatprep.subr.mxu0 0.0
    %1334 = vmatpush2.xpose.msra.mxu0 0.0
    %1335 = vmatprep.subr.mxu0 0.0
    %1336 = vmatpush2.xpose.msra.mxu0 0.0
    %1337 = vmatprep.subr.mxu0 0.0
    %1338 = vmatpush2.xpose.msra.mxu0 0.0
    %1339 = vmatprep.subr.mxu0 0.0
    %1340 = vmatpush2.xpose.msra.mxu0 0.0
    %1341 = vmatprep.subr.mxu0 0.0
    %1342 = vmatpush2.xpose.msra.mxu0 0.0
    %1343 = vmatprep.subr.mxu0 0.0
    %1344 = vmatpush2.xpose.msra.mxu0 0.0
    %1345 = vmatprep.mubr.f32.mxu0 0.0
    %1346 = vmatmul.mubr.f32.gmra.mxu0 %v1277
    %v1347 = vpop.f32.mrf.mxu0
    %v1348 = vadd.f32 0.0, %v1347
    %v1349 = vpop.f32.mrf.mxu0
    %1350 = vdwg.mxu0
    %v1351 = vmul.f32 %v1348, 0.35355338
    %v1352 = vsel %vm206, %v1351, -inf
    %1353 = vmax.xlane.f32.xlu0 %v1352
    %v1354 = vpop.xlane.xlu0 %1353
    %v1355 = vsub.f32 %v1351, %v1354
    %v1356 = vmul.f32 %v1355, 1.442695
    %v1357 = vpow.pop %v1356
    %v1358 = vsel %vm206, %v1357, 0.0
    %1359 = vadd.xlane.f32.xlu0 %v1358
    %v1360 = vpop.xlane.xlu0 %1359
    %v1361 = vrcp.pop %v1360
    %v1362 = vmul.f32 %v1357, %v1361
    %1363 = vrot.lane.b32.xlu0 %v1271, 64
    %v1364 = vpop.permute.xlu0 %1363
    %v1367 = vsel %vm206, %v1362, 0
    %1369 = vmatprep.subr.mxu0 0.0
    %1370 = vmatpush1.msra.mxu0 0.0
    %1371 = vmatprep.subr.mxu0 0.0
    %1372 = vmatpush1.msra.mxu0 0.0
    %1373 = vmatprep.subr.mxu0 0.0
    %1374 = vmatpush1.msra.mxu0 0.0
    %1375 = vmatprep.subr.mxu0 0.0
    %1376 = vmatpush1.msra.mxu0 0.0
    %1377 = vmatprep.subr.mxu0 0.0
    %1378 = vmatpush1.msra.mxu0 0.0
    %1379 = vmatprep.subr.mxu0 0.0
    %1380 = vmatpush1.msra.mxu0 0.0
    %1381 = vmatprep.subr.mxu0 0.0
    %1382 = vmatpush1.msra.mxu0 0.0
    %1383 = vmatprep.subr.mxu0 0.0
    %1384 = vmatpush1.msra.mxu0 0.0
    %1385 = vmatprep.subr.mxu0 0.0
    %1386 = vmatpush1.msra.mxu0 0.0
    %1387 = vmatprep.subr.mxu0 0.0
    %1388 = vmatpush1.msra.mxu0 0.0
    %1389 = vmatprep.subr.mxu0 0.0
    %1390 = vmatpush1.msra.mxu0 0.0
    %1391 = vmatprep.subr.mxu0 0.0
    %1392 = vmatpush1.msra.mxu0 0.0
    %1393 = vmatprep.subr.mxu0 0.0
    %1394 = vmatpush1.msra.mxu0 0.0
    %1395 = vmatprep.subr.mxu0 0.0
    %1396 = vmatpush1.msra.mxu0 0.0
    %1397 = vmatprep.subr.mxu0 0.0
    %1398 = vmatpush1.msra.mxu0 0.0
    %1399 = vmatprep.subr.mxu0 0.0
    %1400 = vmatpush1.msra.mxu0 %v1364
    %1401 = vmatprep.subr.mxu0 0.0
    %1402 = vmatpush2.msra.mxu0 0.0
    %1403 = vmatprep.subr.mxu0 0.0
    %1404 = vmatpush2.msra.mxu0 0.0
    %1405 = vmatprep.subr.mxu0 0.0
    %1406 = vmatpush2.msra.mxu0 0.0
    %1407 = vmatprep.subr.mxu0 0.0
    %1408 = vmatpush2.msra.mxu0 0.0
    %1409 = vmatprep.subr.mxu0 0.0
    %1410 = vmatpush2.msra.mxu0 0.0
    %1411 = vmatprep.subr.mxu0 0.0
    %1412 = vmatpush2.msra.mxu0 0.0
    %1413 = vmatprep.subr.mxu0 0.0
    %1414 = vmatpush2.msra.mxu0 0.0
    %1415 = vmatprep.subr.mxu0 0.0
    %1416 = vmatpush2.msra.mxu0 0.0
    %1417 = vmatprep.subr.mxu0 0.0
    %1418 = vmatpush2.msra.mxu0 0.0
    %1419 = vmatprep.subr.mxu0 0.0
    %1420 = vmatpush2.msra.mxu0 0.0
    %1421 = vmatprep.subr.mxu0 0.0
    %1422 = vmatpush2.msra.mxu0 0.0
    %1423 = vmatprep.subr.mxu0 0.0
    %1424 = vmatpush2.msra.mxu0 0.0
    %1425 = vmatprep.subr.mxu0 0.0
    %1426 = vmatpush2.msra.mxu0 0.0
    %1427 = vmatprep.subr.mxu0 0.0
    %1428 = vmatpush2.msra.mxu0 0.0
    %1429 = vmatprep.subr.mxu0 0.0
    %1430 = vmatpush2.msra.mxu0 0.0
    %1431 = vmatprep.subr.mxu0 0.0
    %1432 = vmatpush2.msra.mxu0 0.0
    %1433 = vmatprep.mubr.f32.mxu0 0.0
    %1434 = vmatmul.mubr.f32.gmra.mxu0 %v1367
    %v1435 = vpop.f32.mrf.mxu0
    %v1436 = vadd.f32 0.0, %v1435
    %v1437 = vpop.f32.mrf.mxu0
    %1438 = vdwg.mxu0
    %1439 = vst.msk [vmem:[#allocation2] sm:$0xff] %vm206, %v1436
    %1440 = vrot.lane.b32.xlu0 %v1271, 120
    %v1441 = vpop.permute.xlu0 %1440
    %1442 = vrot.lane.b32.xlu0 %v1271, 88
    %v1443 = vpop.permute.xlu0 %1442
    %v1444 = vsel %vm206, %v1441, 0
    %v1446 = vsel %vm206, %v1443, 0
    %1448 = vmatprep.subr.mxu0 0.0
    %1449 = vmatpush1.xpose.msra.mxu0 0.0
    %1450 = vmatprep.subr.mxu0 0.0
    %1451 = vmatpush1.xpose.msra.mxu0 0.0
    %1452 = vmatprep.subr.mxu0 0.0
    %1453 = vmatpush1.xpose.msra.mxu0 0.0
    %1454 = vmatprep.subr.mxu0 0.0
    %1455 = vmatpush1.xpose.msra.mxu0 0.0
    %1456 = vmatprep.subr.mxu0 0.0
    %1457 = vmatpush1.xpose.msra.mxu0 0.0
    %1458 = vmatprep.subr.mxu0 0.0
    %1459 = vmatpush1.xpose.msra.mxu0 0.0
    %1460 = vmatprep.subr.mxu0 0.0
    %1461 = vmatpush1.xpose.msra.mxu0 0.0
    %1462 = vmatprep.subr.mxu0 0.0
    %1463 = vmatpush1.xpose.msra.mxu0 0.0
    %1464 = vmatprep.subr.mxu0 0.0
    %1465 = vmatpush1.xpose.msra.mxu0 0.0
    %1466 = vmatprep.subr.mxu0 0.0
    %1467 = vmatpush1.xpose.msra.mxu0 0.0
    %1468 = vmatprep.subr.mxu0 0.0
    %1469 = vmatpush1.xpose.msra.mxu0 0.0
    %1470 = vmatprep.subr.mxu0 0.0
    %1471 = vmatpush1.xpose.msra.mxu0 0.0
    %1472 = vmatprep.subr.mxu0 0.0
    %1473 = vmatpush1.xpose.msra.mxu0 0.0
    %1474 = vmatprep.subr.mxu0 0.0
    %1475 = vmatpush1.xpose.msra.mxu0 0.0
    %1476 = vmatprep.subr.mxu0 0.0
    %1477 = vmatpush1.xpose.msra.mxu0 0.0
    %1478 = vmatprep.subr.mxu0 0.0
    %1479 = vmatpush1.xpose.msra.mxu0 %v1446
    %1480 = vmatprep.subr.mxu0 0.0
    %1481 = vmatpush2.xpose.msra.mxu0 0.0
    %1482 = vmatprep.subr.mxu0 0.0
    %1483 = vmatpush2.xpose.msra.mxu0 0.0
    %1484 = vmatprep.subr.mxu0 0.0
    %1485 = vmatpush2.xpose.msra.mxu0 0.0
    %1486 = vmatprep.subr.mxu0 0.0
    %1487 = vmatpush2.xpose.msra.mxu0 0.0
    %1488 = vmatprep.subr.mxu0 0.0
    %1489 = vmatpush2.xpose.msra.mxu0 0.0
    %1490 = vmatprep.subr.mxu0 0.0
    %1491 = vmatpush2.xpose.msra.mxu0 0.0
    %1492 = vmatprep.subr.mxu0 0.0
    %1493 = vmatpush2.xpose.msra.mxu0 0.0
    %1494 = vmatprep.subr.mxu0 0.0
    %1495 = vmatpush2.xpose.msra.mxu0 0.0
    %1496 = vmatprep.subr.mxu0 0.0
    %1497 = vmatpush2.xpose.msra.mxu0 0.0
    %1498 = vmatprep.subr.mxu0 0.0
    %1499 = vmatpush2.xpose.msra.mxu0 0.0
    %1500 = vmatprep.subr.mxu0 0.0
    %1501 = vmatpush2.xpose.msra.mxu0 0.0
    %1502 = vmatprep.subr.mxu0 0.0
    %1503 = vmatpush2.xpose.msra.mxu0 0.0
    %1504 = vmatprep.subr.mxu0 0.0
    %1505 = vmatpush2.xpose.msra.mxu0 0.0
    %1506 = vmatprep.subr.mxu0 0.0
    %1507 = vmatpush2.xpose.msra.mxu0 0.0
    %1508 = vmatprep.subr.mxu0 0.0
    %1509 = vmatpush2.xpose.msra.mxu0 0.0
    %1510 = vmatprep.subr.mxu0 0.0
    %1511 = vmatpush2.xpose.msra.mxu0 0.0
    %1512 = vmatprep.mubr.f32.mxu0 0.0
    %1513 = vmatmul.mubr.f32.gmra.mxu0 %v1444
    %v1514 = vpop.f32.mrf.mxu0
    %v1515 = vadd.f32 0.0, %v1514
    %v1516 = vpop.f32.mrf.mxu0
    %1517 = vdwg.mxu0
    %v1518 = vmul.f32 %v1515, 0.35355338
    %v1519 = vsel %vm206, %v1518, -inf
    %1520 = vmax.xlane.f32.xlu0 %v1519
    %v1521 = vpop.xlane.xlu0 %1520
    %v1522 = vsub.f32 %v1518, %v1521
    %v1523 = vmul.f32 %v1522, 1.442695
    %v1524 = vpow.pop %v1523
    %v1525 = vsel %vm206, %v1524, 0.0
    %1526 = vadd.xlane.f32.xlu0 %v1525
    %v1527 = vpop.xlane.xlu0 %1526
    %v1528 = vrcp.pop %v1527
    %v1529 = vmul.f32 %v1524, %v1528
    %1530 = vrot.lane.b32.xlu0 %v1271, 56
    %v1531 = vpop.permute.xlu0 %1530
    %v1534 = vsel %vm206, %v1529, 0
    %1536 = vmatprep.subr.mxu0 0.0
    %1537 = vmatpush1.msra.mxu0 0.0
    %1538 = vmatprep.subr.mxu0 0.0
    %1539 = vmatpush1.msra.mxu0 0.0
    %1540 = vmatprep.subr.mxu0 0.0
    %1541 = vmatpush1.msra.mxu0 0.0
    %1542 = vmatprep.subr.mxu0 0.0
    %1543 = vmatpush1.msra.mxu0 0.0
    %1544 = vmatprep.subr.mxu0 0.0
    %1545 = vmatpush1.msra.mxu0 0.0
    %1546 = vmatprep.subr.mxu0 0.0
    %1547 = vmatpush1.msra.mxu0 0.0
    %1548 = vmatprep.subr.mxu0 0.0
    %1549 = vmatpush1.msra.mxu0 0.0
    %1550 = vmatprep.subr.mxu0 0.0
    %1551 = vmatpush1.msra.mxu0 0.0
    %1552 = vmatprep.subr.mxu0 0.0
    %1553 = vmatpush1.msra.mxu0 0.0
    %1554 = vmatprep.subr.mxu0 0.0
    %1555 = vmatpush1.msra.mxu0 0.0
    %1556 = vmatprep.subr.mxu0 0.0
    %1557 = vmatpush1.msra.mxu0 0.0
    %1558 = vmatprep.subr.mxu0 0.0
    %1559 = vmatpush1.msra.mxu0 0.0
    %1560 = vmatprep.subr.mxu0 0.0
    %1561 = vmatpush1.msra.mxu0 0.0
    %1562 = vmatprep.subr.mxu0 0.0
    %1563 = vmatpush1.msra.mxu0 0.0
    %1564 = vmatprep.subr.mxu0 0.0
    %1565 = vmatpush1.msra.mxu0 0.0
    %1566 = vmatprep.subr.mxu0 0.0
    %1567 = vmatpush1.msra.mxu0 %v1531
    %1568 = vmatprep.subr.mxu0 0.0
    %1569 = vmatpush2.msra.mxu0 0.0
    %1570 = vmatprep.subr.mxu0 0.0
    %1571 = vmatpush2.msra.mxu0 0.0
    %1572 = vmatprep.subr.mxu0 0.0
    %1573 = vmatpush2.msra.mxu0 0.0
    %1574 = vmatprep.subr.mxu0 0.0
    %1575 = vmatpush2.msra.mxu0 0.0
    %1576 = vmatprep.subr.mxu0 0.0
    %1577 = vmatpush2.msra.mxu0 0.0
    %1578 = vmatprep.subr.mxu0 0.0
    %1579 = vmatpush2.msra.mxu0 0.0
    %1580 = vmatprep.subr.mxu0 0.0
    %1581 = vmatpush2.msra.mxu0 0.0
    %1582 = vmatprep.subr.mxu0 0.0
    %1583 = vmatpush2.msra.mxu0 0.0
    %1584 = vmatprep.subr.mxu0 0.0
    %1585 = vmatpush2.msra.mxu0 0.0
    %1586 = vmatprep.subr.mxu0 0.0
    %1587 = vmatpush2.msra.mxu0 0.0
    %1588 = vmatprep.subr.mxu0 0.0
    %1589 = vmatpush2.msra.mxu0 0.0
    %1590 = vmatprep.subr.mxu0 0.0
    %1591 = vmatpush2.msra.mxu0 0.0
    %1592 = vmatprep.subr.mxu0 0.0
    %1593 = vmatpush2.msra.mxu0 0.0
    %1594 = vmatprep.subr.mxu0 0.0
    %1595 = vmatpush2.msra.mxu0 0.0
    %1596 = vmatprep.subr.mxu0 0.0
    %1597 = vmatpush2.msra.mxu0 0.0
    %1598 = vmatprep.subr.mxu0 0.0
    %1599 = vmatpush2.msra.mxu0 0.0
    %1600 = vmatprep.mubr.f32.mxu0 0.0
    %1601 = vmatmul.mubr.f32.gmra.mxu0 %v1534
    %v1602 = vpop.f32.mrf.mxu0
    %v1603 = vadd.f32 0.0, %v1602
    %v1604 = vpop.f32.mrf.mxu0
    %1605 = vdwg.mxu0
    %1607 = vrot.lane.b32.xlu0 %v1603, 8
    %v1608 = vpop.permute.xlu0 %1607
    %1610 = vst.msk [vmem:[#allocation2] sm:$0xff] %vm540, %v1608
    %1611 = vrot.lane.b32.xlu0 %v1271, 112
    %v1612 = vpop.permute.xlu0 %1611
    %1613 = vrot.lane.b32.xlu0 %v1271, 80
    %v1614 = vpop.permute.xlu0 %1613
    %v1615 = vsel %vm206, %v1612, 0
    %v1617 = vsel %vm206, %v1614, 0
    %1619 = vmatprep.subr.mxu0 0.0
    %1620 = vmatpush1.xpose.msra.mxu0 0.0
    %1621 = vmatprep.subr.mxu0 0.0
    %1622 = vmatpush1.xpose.msra.mxu0 0.0
    %1623 = vmatprep.subr.mxu0 0.0
    %1624 = vmatpush1.xpose.msra.mxu0 0.0
    %1625 = vmatprep.subr.mxu0 0.0
    %1626 = vmatpush1.xpose.msra.mxu0 0.0
    %1627 = vmatprep.subr.mxu0 0.0
    %1628 = vmatpush1.xpose.msra.mxu0 0.0
    %1629 = vmatprep.subr.mxu0 0.0
    %1630 = vmatpush1.xpose.msra.mxu0 0.0
    %1631 = vmatprep.subr.mxu0 0.0
    %1632 = vmatpush1.xpose.msra.mxu0 0.0
    %1633 = vmatprep.subr.mxu0 0.0
    %1634 = vmatpush1.xpose.msra.mxu0 0.0
    %1635 = vmatprep.subr.mxu0 0.0
    %1636 = vmatpush1.xpose.msra.mxu0 0.0
    %1637 = vmatprep.subr.mxu0 0.0
    %1638 = vmatpush1.xpose.msra.mxu0 0.0
    %1639 = vmatprep.subr.mxu0 0.0
    %1640 = vmatpush1.xpose.msra.mxu0 0.0
    %1641 = vmatprep.subr.mxu0 0.0
    %1642 = vmatpush1.xpose.msra.mxu0 0.0
    %1643 = vmatprep.subr.mxu0 0.0
    %1644 = vmatpush1.xpose.msra.mxu0 0.0
    %1645 = vmatprep.subr.mxu0 0.0
    %1646 = vmatpush1.xpose.msra.mxu0 0.0
    %1647 = vmatprep.subr.mxu0 0.0
    %1648 = vmatpush1.xpose.msra.mxu0 0.0
    %1649 = vmatprep.subr.mxu0 0.0
    %1650 = vmatpush1.xpose.msra.mxu0 %v1617
    %1651 = vmatprep.subr.mxu0 0.0
    %1652 = vmatpush2.xpose.msra.mxu0 0.0
    %1653 = vmatprep.subr.mxu0 0.0
    %1654 = vmatpush2.xpose.msra.mxu0 0.0
    %1655 = vmatprep.subr.mxu0 0.0
    %1656 = vmatpush2.xpose.msra.mxu0 0.0
    %1657 = vmatprep.subr.mxu0 0.0
    %1658 = vmatpush2.xpose.msra.mxu0 0.0
    %1659 = vmatprep.subr.mxu0 0.0
    %1660 = vmatpush2.xpose.msra.mxu0 0.0
    %1661 = vmatprep.subr.mxu0 0.0
    %1662 = vmatpush2.xpose.msra.mxu0 0.0
    %1663 = vmatprep.subr.mxu0 0.0
    %1664 = vmatpush2.xpose.msra.mxu0 0.0
    %1665 = vmatprep.subr.mxu0 0.0
    %1666 = vmatpush2.xpose.msra.mxu0 0.0
    %1667 = vmatprep.subr.mxu0 0.0
    %1668 = vmatpush2.xpose.msra.mxu0 0.0
    %1669 = vmatprep.subr.mxu0 0.0
    %1670 = vmatpush2.xpose.msra.mxu0 0.0
    %1671 = vmatprep.subr.mxu0 0.0
    %1672 = vmatpush2.xpose.msra.mxu0 0.0
    %1673 = vmatprep.subr.mxu0 0.0
    %1674 = vmatpush2.xpose.msra.mxu0 0.0
    %1675 = vmatprep.subr.mxu0 0.0
    %1676 = vmatpush2.xpose.msra.mxu0 0.0
    %1677 = vmatprep.subr.mxu0 0.0
    %1678 = vmatpush2.xpose.msra.mxu0 0.0
    %1679 = vmatprep.subr.mxu0 0.0
    %1680 = vmatpush2.xpose.msra.mxu0 0.0
    %1681 = vmatprep.subr.mxu0 0.0
    %1682 = vmatpush2.xpose.msra.mxu0 0.0
    %1683 = vmatprep.mubr.f32.mxu0 0.0
    %1684 = vmatmul.mubr.f32.gmra.mxu0 %v1615
    %v1685 = vpop.f32.mrf.mxu0
    %v1686 = vadd.f32 0.0, %v1685
    %v1687 = vpop.f32.mrf.mxu0
    %1688 = vdwg.mxu0
    %v1689 = vmul.f32 %v1686, 0.35355338
    %v1690 = vsel %vm206, %v1689, -inf
    %1691 = vmax.xlane.f32.xlu0 %v1690
    %v1692 = vpop.xlane.xlu0 %1691
    %v1693 = vsub.f32 %v1689, %v1692
    %v1694 = vmul.f32 %v1693, 1.442695
    %v1695 = vpow.pop %v1694
    %v1696 = vsel %vm206, %v1695, 0.0
    %1697 = vadd.xlane.f32.xlu0 %v1696
    %v1698 = vpop.xlane.xlu0 %1697
    %v1699 = vrcp.pop %v1698
    %v1700 = vmul.f32 %v1695, %v1699
    %1701 = vrot.lane.b32.xlu0 %v1271, 48
    %v1702 = vpop.permute.xlu0 %1701
    %v1705 = vsel %vm206, %v1700, 0
    %1707 = vmatprep.subr.mxu0 0.0
    %1708 = vmatpush1.msra.mxu0 0.0
    %1709 = vmatprep.subr.mxu0 0.0
    %1710 = vmatpush1.msra.mxu0 0.0
    %1711 = vmatprep.subr.mxu0 0.0
    %1712 = vmatpush1.msra.mxu0 0.0
    %1713 = vmatprep.subr.mxu0 0.0
    %1714 = vmatpush1.msra.mxu0 0.0
    %1715 = vmatprep.subr.mxu0 0.0
    %1716 = vmatpush1.msra.mxu0 0.0
    %1717 = vmatprep.subr.mxu0 0.0
    %1718 = vmatpush1.msra.mxu0 0.0
    %1719 = vmatprep.subr.mxu0 0.0
    %1720 = vmatpush1.msra.mxu0 0.0
    %1721 = vmatprep.subr.mxu0 0.0
    %1722 = vmatpush1.msra.mxu0 0.0
    %1723 = vmatprep.subr.mxu0 0.0
    %1724 = vmatpush1.msra.mxu0 0.0
    %1725 = vmatprep.subr.mxu0 0.0
    %1726 = vmatpush1.msra.mxu0 0.0
    %1727 = vmatprep.subr.mxu0 0.0
    %1728 = vmatpush1.msra.mxu0 0.0
    %1729 = vmatprep.subr.mxu0 0.0
    %1730 = vmatpush1.msra.mxu0 0.0
    %1731 = vmatprep.subr.mxu0 0.0
    %1732 = vmatpush1.msra.mxu0 0.0
    %1733 = vmatprep.subr.mxu0 0.0
    %1734 = vmatpush1.msra.mxu0 0.0
    %1735 = vmatprep.subr.mxu0 0.0
    %1736 = vmatpush1.msra.mxu0 0.0
    %1737 = vmatprep.subr.mxu0 0.0
    %1738 = vmatpush1.msra.mxu0 %v1702
    %1739 = vmatprep.subr.mxu0 0.0
    %1740 = vmatpush2.msra.mxu0 0.0
    %1741 = vmatprep.subr.mxu0 0.0
    %1742 = vmatpush2.msra.mxu0 0.0
    %1743 = vmatprep.subr.mxu0 0.0
    %1744 = vmatpush2.msra.mxu0 0.0
    %1745 = vmatprep.subr.mxu0 0.0
    %1746 = vmatpush2.msra.mxu0 0.0
    %1747 = vmatprep.subr.mxu0 0.0
    %1748 = vmatpush2.msra.mxu0 0.0
    %1749 = vmatprep.subr.mxu0 0.0
    %1750 = vmatpush2.msra.mxu0 0.0
    %1751 = vmatprep.subr.mxu0 0.0
    %1752 = vmatpush2.msra.mxu0 0.0
    %1753 = vmatprep.subr.mxu0 0.0
    %1754 = vmatpush2.msra.mxu0 0.0
    %1755 = vmatprep.subr.mxu0 0.0
    %1756 = vmatpush2.msra.mxu0 0.0
    %1757 = vmatprep.subr.mxu0 0.0
    %1758 = vmatpush2.msra.mxu0 0.0
    %1759 = vmatprep.subr.mxu0 0.0
    %1760 = vmatpush2.msra.mxu0 0.0
    %1761 = vmatprep.subr.mxu0 0.0
    %1762 = vmatpush2.msra.mxu0 0.0
    %1763 = vmatprep.subr.mxu0 0.0
    %1764 = vmatpush2.msra.mxu0 0.0
    %1765 = vmatprep.subr.mxu0 0.0
    %1766 = vmatpush2.msra.mxu0 0.0
    %1767 = vmatprep.subr.mxu0 0.0
    %1768 = vmatpush2.msra.mxu0 0.0
    %1769 = vmatprep.subr.mxu0 0.0
    %1770 = vmatpush2.msra.mxu0 0.0
    %1771 = vmatprep.mubr.f32.mxu0 0.0
    %1772 = vmatmul.mubr.f32.gmra.mxu0 %v1705
    %v1773 = vpop.f32.mrf.mxu0
    %v1774 = vadd.f32 0.0, %v1773
    %v1775 = vpop.f32.mrf.mxu0
    %1776 = vdwg.mxu0
    %1778 = vrot.lane.b32.xlu0 %v1774, 16
    %v1779 = vpop.permute.xlu0 %1778
    %1781 = vst.msk [vmem:[#allocation2] sm:$0xff] %vm712, %v1779
    %1782 = vrot.lane.b32.xlu0 %v1271, 104
    %v1783 = vpop.permute.xlu0 %1782
    %1784 = vrot.lane.b32.xlu0 %v1271, 72
    %v1785 = vpop.permute.xlu0 %1784
    %v1786 = vsel %vm206, %v1783, 0
    %v1788 = vsel %vm206, %v1785, 0
    %1790 = vmatprep.subr.mxu0 0.0
    %1791 = vmatpush1.xpose.msra.mxu0 0.0
    %1792 = vmatprep.subr.mxu0 0.0
    %1793 = vmatpush1.xpose.msra.mxu0 0.0
    %1794 = vmatprep.subr.mxu0 0.0
    %1795 = vmatpush1.xpose.msra.mxu0 0.0
    %1796 = vmatprep.subr.mxu0 0.0
    %1797 = vmatpush1.xpose.msra.mxu0 0.0
    %1798 = vmatprep.subr.mxu0 0.0
    %1799 = vmatpush1.xpose.msra.mxu0 0.0
    %1800 = vmatprep.subr.mxu0 0.0
    %1801 = vmatpush1.xpose.msra.mxu0 0.0
    %1802 = vmatprep.subr.mxu0 0.0
    %1803 = vmatpush1.xpose.msra.mxu0 0.0
    %1804 = vmatprep.subr.mxu0 0.0
    %1805 = vmatpush1.xpose.msra.mxu0 0.0
    %1806 = vmatprep.subr.mxu0 0.0
    %1807 = vmatpush1.xpose.msra.mxu0 0.0
    %1808 = vmatprep.subr.mxu0 0.0
    %1809 = vmatpush1.xpose.msra.mxu0 0.0
    %1810 = vmatprep.subr.mxu0 0.0
    %1811 = vmatpush1.xpose.msra.mxu0 0.0
    %1812 = vmatprep.subr.mxu0 0.0
    %1813 = vmatpush1.xpose.msra.mxu0 0.0
    %1814 = vmatprep.subr.mxu0 0.0
    %1815 = vmatpush1.xpose.msra.mxu0 0.0
    %1816 = vmatprep.subr.mxu0 0.0
    %1817 = vmatpush1.xpose.msra.mxu0 0.0
    %1818 = vmatprep.subr.mxu0 0.0
    %1819 = vmatpush1.xpose.msra.mxu0 0.0
    %1820 = vmatprep.subr.mxu0 0.0
    %1821 = vmatpush1.xpose.msra.mxu0 %v1788
    %1822 = vmatprep.subr.mxu0 0.0
    %1823 = vmatpush2.xpose.msra.mxu0 0.0
    %1824 = vmatprep.subr.mxu0 0.0
    %1825 = vmatpush2.xpose.msra.mxu0 0.0
    %1826 = vmatprep.subr.mxu0 0.0
    %1827 = vmatpush2.xpose.msra.mxu0 0.0
    %1828 = vmatprep.subr.mxu0 0.0
    %1829 = vmatpush2.xpose.msra.mxu0 0.0
    %1830 = vmatprep.subr.mxu0 0.0
    %1831 = vmatpush2.xpose.msra.mxu0 0.0
    %1832 = vmatprep.subr.mxu0 0.0
    %1833 = vmatpush2.xpose.msra.mxu0 0.0
    %1834 = vmatprep.subr.mxu0 0.0
    %1835 = vmatpush2.xpose.msra.mxu0 0.0
    %1836 = vmatprep.subr.mxu0 0.0
    %1837 = vmatpush2.xpose.msra.mxu0 0.0
    %1838 = vmatprep.subr.mxu0 0.0
    %1839 = vmatpush2.xpose.msra.mxu0 0.0
    %1840 = vmatprep.subr.mxu0 0.0
    %1841 = vmatpush2.xpose.msra.mxu0 0.0
    %1842 = vmatprep.subr.mxu0 0.0
    %1843 = vmatpush2.xpose.msra.mxu0 0.0
    %1844 = vmatprep.subr.mxu0 0.0
    %1845 = vmatpush2.xpose.msra.mxu0 0.0
    %1846 = vmatprep.subr.mxu0 0.0
    %1847 = vmatpush2.xpose.msra.mxu0 0.0
    %1848 = vmatprep.subr.mxu0 0.0
    %1849 = vmatpush2.xpose.msra.mxu0 0.0
    %1850 = vmatprep.subr.mxu0 0.0
    %1851 = vmatpush2.xpose.msra.mxu0 0.0
    %1852 = vmatprep.subr.mxu0 0.0
    %1853 = vmatpush2.xpose.msra.mxu0 0.0
    %1854 = vmatprep.mubr.f32.mxu0 0.0
    %1855 = vmatmul.mubr.f32.gmra.mxu0 %v1786
    %v1856 = vpop.f32.mrf.mxu0
    %v1857 = vadd.f32 0.0, %v1856
    %v1858 = vpop.f32.mrf.mxu0
    %1859 = vdwg.mxu0
    %v1860 = vmul.f32 %v1857, 0.35355338
    %v1861 = vsel %vm206, %v1860, -inf
    %1862 = vmax.xlane.f32.xlu0 %v1861
    %v1863 = vpop.xlane.xlu0 %1862
    %v1864 = vsub.f32 %v1860, %v1863
    %v1865 = vmul.f32 %v1864, 1.442695
    %v1866 = vpow.pop %v1865
    %v1867 = vsel %vm206, %v1866, 0.0
    %1868 = vadd.xlane.f32.xlu0 %v1867
    %v1869 = vpop.xlane.xlu0 %1868
    %v1870 = vrcp.pop %v1869
    %v1871 = vmul.f32 %v1866, %v1870
    %1872 = vrot.lane.b32.xlu0 %v1271, 40
    %v1873 = vpop.permute.xlu0 %1872
    %v1876 = vsel %vm206, %v1871, 0
    %1878 = vmatprep.subr.mxu0 0.0
    %1879 = vmatpush1.msra.mxu0 0.0
    %1880 = vmatprep.subr.mxu0 0.0
    %1881 = vmatpush1.msra.mxu0 0.0
    %1882 = vmatprep.subr.mxu0 0.0
    %1883 = vmatpush1.msra.mxu0 0.0
    %1884 = vmatprep.subr.mxu0 0.0
    %1885 = vmatpush1.msra.mxu0 0.0
    %1886 = vmatprep.subr.mxu0 0.0
    %1887 = vmatpush1.msra.mxu0 0.0
    %1888 = vmatprep.subr.mxu0 0.0
    %1889 = vmatpush1.msra.mxu0 0.0
    %1890 = vmatprep.subr.mxu0 0.0
    %1891 = vmatpush1.msra.mxu0 0.0
    %1892 = vmatprep.subr.mxu0 0.0
    %1893 = vmatpush1.msra.mxu0 0.0
    %1894 = vmatprep.subr.mxu0 0.0
    %1895 = vmatpush1.msra.mxu0 0.0
    %1896 = vmatprep.subr.mxu0 0.0
    %1897 = vmatpush1.msra.mxu0 0.0
    %1898 = vmatprep.subr.mxu0 0.0
    %1899 = vmatpush1.msra.mxu0 0.0
    %1900 = vmatprep.subr.mxu0 0.0
    %1901 = vmatpush1.msra.mxu0 0.0
    %1902 = vmatprep.subr.mxu0 0.0
    %1903 = vmatpush1.msra.mxu0 0.0
    %1904 = vmatprep.subr.mxu0 0.0
    %1905 = vmatpush1.msra.mxu0 0.0
    %1906 = vmatprep.subr.mxu0 0.0
    %1907 = vmatpush1.msra.mxu0 0.0
    %1908 = vmatprep.subr.mxu0 0.0
    %1909 = vmatpush1.msra.mxu0 %v1873
    %1910 = vmatprep.subr.mxu0 0.0
    %1911 = vmatpush2.msra.mxu0 0.0
    %1912 = vmatprep.subr.mxu0 0.0
    %1913 = vmatpush2.msra.mxu0 0.0
    %1914 = vmatprep.subr.mxu0 0.0
    %1915 = vmatpush2.msra.mxu0 0.0
    %1916 = vmatprep.subr.mxu0 0.0
    %1917 = vmatpush2.msra.mxu0 0.0
    %1918 = vmatprep.subr.mxu0 0.0
    %1919 = vmatpush2.msra.mxu0 0.0
    %1920 = vmatprep.subr.mxu0 0.0
    %1921 = vmatpush2.msra.mxu0 0.0
    %1922 = vmatprep.subr.mxu0 0.0
    %1923 = vmatpush2.msra.mxu0 0.0
    %1924 = vmatprep.subr.mxu0 0.0
    %1925 = vmatpush2.msra.mxu0 0.0
    %1926 = vmatprep.subr.mxu0 0.0
    %1927 = vmatpush2.msra.mxu0 0.0
    %1928 = vmatprep.subr.mxu0 0.0
    %1929 = vmatpush2.msra.mxu0 0.0
    %1930 = vmatprep.subr.mxu0 0.0
    %1931 = vmatpush2.msra.mxu0 0.0
    %1932 = vmatprep.subr.mxu0 0.0
    %1933 = vmatpush2.msra.mxu0 0.0
    %1934 = vmatprep.subr.mxu0 0.0
    %1935 = vmatpush2.msra.mxu0 0.0
    %1936 = vmatprep.subr.mxu0 0.0
    %1937 = vmatpush2.msra.mxu0 0.0
    %1938 = vmatprep.subr.mxu0 0.0
    %1939 = vmatpush2.msra.mxu0 0.0
    %1940 = vmatprep.subr.mxu0 0.0
    %1941 = vmatpush2.msra.mxu0 0.0
    %1942 = vmatprep.mubr.f32.mxu0 0.0
    %1943 = vmatmul.mubr.f32.gmra.mxu0 %v1876
    %v1944 = vpop.f32.mrf.mxu0
    %v1945 = vadd.f32 0.0, %v1944
    %v1946 = vpop.f32.mrf.mxu0
    %1947 = vdwg.mxu0
    %1949 = vrot.lane.b32.xlu0 %v1945, 24
    %v1950 = vpop.permute.xlu0 %1949
    %1952 = vst.msk [vmem:[#allocation2] sm:$0xff] %vm884, %v1950
    %v1953 = vld [vmem:[#allocation2] sm:$0xff]
    %v1954 = vld [vmem:[#allocation6 + $0x120] sm:$0xff]
    %v1955 = vld [vmem:[#allocation6 + $0x128] sm:$0xff]
    %v1956 = vld [vmem:[#allocation6 + $0x130] sm:$0xff]
    %v1957 = vld [vmem:[#allocation6 + $0x138] sm:$0xff]
    %v1958 = vld [vmem:[#allocation6 + $0x140] sm:$0x1]
    %v1959 = vlaneseq
    %v1960 = vshrl.u32 %v1959, 7
    %v1961 = vsub.s32 0, %v1960
    %v1962 = vrot.slane %v1958, %v1961
    %v1964 = vsel %vm129, %v1953, 0
    %1966 = vmatprep.subr.mxu0 0.0
    %1967 = vmatpush1.msra.mxu0 0.0
    %1968 = vmatprep.subr.mxu0 0.0
    %1969 = vmatpush1.msra.mxu0 0.0
    %1970 = vmatprep.subr.mxu0 0.0
    %1971 = vmatpush1.msra.mxu0 0.0
    %1972 = vmatprep.subr.mxu0 0.0
    %1973 = vmatpush1.msra.mxu0 0.0
    %1974 = vmatprep.subr.mxu0 0.0
    %1975 = vmatpush1.msra.mxu0 0.0
    %1976 = vmatprep.subr.mxu0 0.0
    %1977 = vmatpush1.msra.mxu0 0.0
    %1978 = vmatprep.subr.mxu0 0.0
    %1979 = vmatpush1.msra.mxu0 0.0
    %1980 = vmatprep.subr.mxu0 0.0
    %1981 = vmatpush1.msra.mxu0 0.0
    %1982 = vmatprep.subr.mxu0 0.0
    %1983 = vmatpush1.msra.mxu0 0.0
    %1984 = vmatprep.subr.mxu0 0.0
    %1985 = vmatpush1.msra.mxu0 0.0
    %1986 = vmatprep.subr.mxu0 0.0
    %1987 = vmatpush1.msra.mxu0 0.0
    %1988 = vmatprep.subr.mxu0 0.0
    %1989 = vmatpush1.msra.mxu0 0.0
    %1990 = vmatprep.subr.mxu0 0.0
    %1991 = vmatpush1.msra.mxu0 %v1957
    %1992 = vmatprep.subr.mxu0 0.0
    %1993 = vmatpush1.msra.mxu0 %v1956
    %1994 = vmatprep.subr.mxu0 0.0
    %1995 = vmatpush1.msra.mxu0 %v1955
    %1996 = vmatprep.subr.mxu0 0.0
    %1997 = vmatpush1.msra.mxu0 %v1954
    %1998 = vmatprep.subr.mxu0 0.0
    %1999 = vmatpush2.msra.mxu0 0.0
    %2000 = vmatprep.subr.mxu0 0.0
    %2001 = vmatpush2.msra.mxu0 0.0
    %2002 = vmatprep.subr.mxu0 0.0
    %2003 = vmatpush2.msra.mxu0 0.0
    %2004 = vmatprep.subr.mxu0 0.0
    %2005 = vmatpush2.msra.mxu0 0.0
    %2006 = vmatprep.subr.mxu0 0.0
    %2007 = vmatpush2.msra.mxu0 0.0
    %2008 = vmatprep.subr.mxu0 0.0
    %2009 = vmatpush2.msra.mxu0 0.0
    %2010 = vmatprep.subr.mxu0 0.0
    %2011 = vmatpush2.msra.mxu0 0.0
    %2012 = vmatprep.subr.mxu0 0.0
    %2013 = vmatpush2.msra.mxu0 0.0
    %2014 = vmatprep.subr.mxu0 0.0
    %2015 = vmatpush2.msra.mxu0 0.0
    %2016 = vmatprep.subr.mxu0 0.0
    %2017 = vmatpush2.msra.mxu0 0.0
    %2018 = vmatprep.subr.mxu0 0.0
    %2019 = vmatpush2.msra.mxu0 0.0
    %2020 = vmatprep.subr.mxu0 0.0
    %2021 = vmatpush2.msra.mxu0 0.0
    %2022 = vmatprep.subr.mxu0 0.0
    %2023 = vmatpush2.msra.mxu0 0.0
    %2024 = vmatprep.subr.mxu0 0.0
    %2025 = vmatpush2.msra.mxu0 0.0
    %2026 = vmatprep.subr.mxu0 0.0
    %2027 = vmatpush2.msra.mxu0 0.0
    %2028 = vmatprep.subr.mxu0 0.0
    %2029 = vmatpush2.msra.mxu0 0.0
    %2030 = vmatprep.mubr.f32.mxu0 0.0
    %2031 = vmatmul.mubr.f32.gmra.mxu0 %v1964
    %v2032 = vpop.f32.mrf.mxu0
    %v2033 = vadd.f32 %v1962, %v2032
    %v2034 = vpop.f32.mrf.mxu0
    %2035 = vdwg.mxu0
    %v2036 = vadd.f32 %v1191, %v2033
    %v2037 = vld [vmem:[#allocation6 + $0x148] sm:$0x1]
    %v2038 = vld [vmem:[#allocation6 + $0x150] sm:$0x1]
    %v2039 = vsel %vm129, %v2036, 0.0
    %2040 = vadd.xlane.f32.xlu0 %v2039
    %v2041 = vpop.xlane.xlu0 %2040
    %v2042 = vmul.f32 %v2041, %v975
    %v2043 = vsub.f32 %v2036, %v2042
    %v2044 = vmul.f32 %v2043, %v2043
    %v2045 = vsel %vm129, %v2044, 0.0
    %2046 = vadd.xlane.f32.xlu0 %v2045
    %v2047 = vpop.xlane.xlu0 %2046
    %v2048 = vmul.f32 %v2047, %v975
    %v2049 = vadd.f32 %v2048, 1e-05
    %v2050 = vrsqrt.pop %v2049
    %v2051 = vmul.f32 %v2043, %v2050
    %v2052 = vlaneseq
    %v2053 = vshrl.u32 %v2052, 7
    %v2054 = vsub.s32 0, %v2053
    %v2055 = vrot.slane %v2037, %v2054
    %v2056 = vmul.f32 %v2051, %v2055
    %v2057 = vlaneseq
    %v2058 = vshrl.u32 %v2057, 7
    %v2059 = vsub.s32 0, %v2058
    %v2060 = vrot.slane %v2038, %v2059
    %v2061 = vadd.f32 %v2056, %v2060
    %v2062 = vld [vmem:[#allocation6 + $0x158] sm:$0xff]
    %v2063 = vld [vmem:[#allocation6 + $0x160] sm:$0xff]
    %v2064 = vld [vmem:[#allocation6 + $0x168] sm:$0xff]
    %v2065 = vld [vmem:[#allocation6 + $0x170] sm:$0xff]
    %v2066 = vld [vmem:[#allocation6 + $0x178] sm:$0x1]
    %v2067 = vlaneseq
    %v2068 = vshrl.u32 %v2067, 7
    %v2069 = vsub.s32 0, %v2068
    %v2070 = vrot.slane %v2066, %v2069
    %v2072 = vsel %vm129, %v2061, 0
    %2074 = vmatprep.subr.mxu0 0.0
    %2075 = vmatpush1.msra.mxu0 0.0
    %2076 = vmatprep.subr.mxu0 0.0
    %2077 = vmatpush1.msra.mxu0 0.0
    %2078 = vmatprep.subr.mxu0 0.0
    %2079 = vmatpush1.msra.mxu0 0.0
    %2080 = vmatprep.subr.mxu0 0.0
    %2081 = vmatpush1.msra.mxu0 0.0
    %2082 = vmatprep.subr.mxu0 0.0
    %2083 = vmatpush1.msra.mxu0 0.0
    %2084 = vmatprep.subr.mxu0 0.0
    %2085 = vmatpush1.msra.mxu0 0.0
    %2086 = vmatprep.subr.mxu0 0.0
    %2087 = vmatpush1.msra.mxu0 0.0
    %2088 = vmatprep.subr.mxu0 0.0
    %2089 = vmatpush1.msra.mxu0 0.0
    %2090 = vmatprep.subr.mxu0 0.0
    %2091 = vmatpush1.msra.mxu0 0.0
    %2092 = vmatprep.subr.mxu0 0.0
    %2093 = vmatpush1.msra.mxu0 0.0
    %2094 = vmatprep.subr.mxu0 0.0
    %2095 = vmatpush1.msra.mxu0 0.0
    %2096 = vmatprep.subr.mxu0 0.0
    %2097 = vmatpush1.msra.mxu0 0.0
    %2098 = vmatprep.subr.mxu0 0.0
    %2099 = vmatpush1.msra.mxu0 %v2065
    %2100 = vmatprep.subr.mxu0 0.0
    %2101 = vmatpush1.msra.mxu0 %v2064
    %2102 = vmatprep.subr.mxu0 0.0
    %2103 = vmatpush1.msra.mxu0 %v2063
    %2104 = vmatprep.subr.mxu0 0.0
    %2105 = vmatpush1.msra.mxu0 %v2062
    %2106 = vmatprep.subr.mxu0 0.0
    %2107 = vmatpush2.msra.mxu0 0.0
    %2108 = vmatprep.subr.mxu0 0.0
    %2109 = vmatpush2.msra.mxu0 0.0
    %2110 = vmatprep.subr.mxu0 0.0
    %2111 = vmatpush2.msra.mxu0 0.0
    %2112 = vmatprep.subr.mxu0 0.0
    %2113 = vmatpush2.msra.mxu0 0.0
    %2114 = vmatprep.subr.mxu0 0.0
    %2115 = vmatpush2.msra.mxu0 0.0
    %2116 = vmatprep.subr.mxu0 0.0
    %2117 = vmatpush2.msra.mxu0 0.0
    %2118 = vmatprep.subr.mxu0 0.0
    %2119 = vmatpush2.msra.mxu0 0.0
    %2120 = vmatprep.subr.mxu0 0.0
    %2121 = vmatpush2.msra.mxu0 0.0
    %2122 = vmatprep.subr.mxu0 0.0
    %2123 = vmatpush2.msra.mxu0 0.0
    %2124 = vmatprep.subr.mxu0 0.0
    %2125 = vmatpush2.msra.mxu0 0.0
    %2126 = vmatprep.subr.mxu0 0.0
    %2127 = vmatpush2.msra.mxu0 0.0
    %2128 = vmatprep.subr.mxu0 0.0
    %2129 = vmatpush2.msra.mxu0 0.0
    %2130 = vmatprep.subr.mxu0 0.0
    %2131 = vmatpush2.msra.mxu0 0.0
    %2132 = vmatprep.subr.mxu0 0.0
    %2133 = vmatpush2.msra.mxu0 0.0
    %2134 = vmatprep.subr.mxu0 0.0
    %2135 = vmatpush2.msra.mxu0 0.0
    %2136 = vmatprep.subr.mxu0 0.0
    %2137 = vmatpush2.msra.mxu0 0.0
    %2138 = vmatprep.mubr.f32.mxu0 0.0
    %2139 = vmatmul.mubr.f32.gmra.mxu0 %v2072
    %v2140 = vpop.f32.mrf.mxu0
    %v2141 = vadd.f32 %v2070, %v2140
    %v2142 = vpop.f32.mrf.mxu0
    %2143 = vdwg.mxu0
    %v2144 = vmax.f32 %v2141, 0.0
    %v2145 = vld [vmem:[#allocation6 + $0x180] sm:$0xff]
    %v2146 = vld [vmem:[#allocation6 + $0x188] sm:$0xff]
    %v2147 = vld [vmem:[#allocation6 + $0x190] sm:$0xff]
    %v2148 = vld [vmem:[#allocation6 + $0x198] sm:$0xff]
    %v2149 = vld [vmem:[#allocation6 + $0x1a0] sm:$0xff]
    %v2150 = vld [vmem:[#allocation6 + $0x1a8] sm:$0xff]
    %v2151 = vld [vmem:[#allocation6 + $0x1b0] sm:$0xff]
    %v2152 = vld [vmem:[#allocation6 + $0x1b8] sm:$0xff]
    %v2153 = vld [vmem:[#allocation6 + $0x1c0] sm:$0x1]
    %v2154 = vlaneseq
    %v2155 = vshrl.u32 %v2154, 7
    %v2156 = vsub.s32 0, %v2155
    %v2157 = vrot.slane %v2153, %v2156
    %v2159 = vsel %vm1092, %v2144, 0
    %2161 = vmatprep.subr.mxu0 0.0
    %2162 = vmatpush1.msra.mxu0 0.0
    %2163 = vmatprep.subr.mxu0 0.0
    %2164 = vmatpush1.msra.mxu0 0.0
    %2165 = vmatprep.subr.mxu0 0.0
    %2166 = vmatpush1.msra.mxu0 0.0
    %2167 = vmatprep.subr.mxu0 0.0
    %2168 = vmatpush1.msra.mxu0 0.0
    %2169 = vmatprep.subr.mxu0 0.0
    %2170 = vmatpush1.msra.mxu0 0.0
    %2171 = vmatprep.subr.mxu0 0.0
    %2172 = vmatpush1.msra.mxu0 0.0
    %2173 = vmatprep.subr.mxu0 0.0
    %2174 = vmatpush1.msra.mxu0 0.0
    %2175 = vmatprep.subr.mxu0 0.0
    %2176 = vmatpush1.msra.mxu0 0.0
    %2177 = vmatprep.subr.mxu0 0.0
    %2178 = vmatpush1.msra.mxu0 %v2152
    %2179 = vmatprep.subr.mxu0 0.0
    %2180 = vmatpush1.msra.mxu0 %v2151
    %2181 = vmatprep.subr.mxu0 0.0
    %2182 = vmatpush1.msra.mxu0 %v2150
    %2183 = vmatprep.subr.mxu0 0.0
    %2184 = vmatpush1.msra.mxu0 %v2149
    %2185 = vmatprep.subr.mxu0 0.0
    %2186 = vmatpush1.msra.mxu0 %v2148
    %2187 = vmatprep.subr.mxu0 0.0
    %2188 = vmatpush1.msra.mxu0 %v2147
    %2189 = vmatprep.subr.mxu0 0.0
    %2190 = vmatpush1.msra.mxu0 %v2146
    %2191 = vmatprep.subr.mxu0 0.0
    %2192 = vmatpush1.msra.mxu0 %v2145
    %2193 = vmatprep.subr.mxu0 0.0
    %2194 = vmatpush2.msra.mxu0 0.0
    %2195 = vmatprep.subr.mxu0 0.0
    %2196 = vmatpush2.msra.mxu0 0.0
    %2197 = vmatprep.subr.mxu0 0.0
    %2198 = vmatpush2.msra.mxu0 0.0
    %2199 = vmatprep.subr.mxu0 0.0
    %2200 = vmatpush2.msra.mxu0 0.0
    %2201 = vmatprep.subr.mxu0 0.0
    %2202 = vmatpush2.msra.mxu0 0.0
    %2203 = vmatprep.subr.mxu0 0.0
    %2204 = vmatpush2.msra.mxu0 0.0
    %2205 = vmatprep.subr.mxu0 0.0
    %2206 = vmatpush2.msra.mxu0 0.0
    %2207 = vmatprep.subr.mxu0 0.0
    %2208 = vmatpush2.msra.mxu0 0.0
    %2209 = vmatprep.subr.mxu0 0.0
    %2210 = vmatpush2.msra.mxu0 0.0
    %2211 = vmatprep.subr.mxu0 0.0
    %2212 = vmatpush2.msra.mxu0 0.0
    %2213 = vmatprep.subr.mxu0 0.0
    %2214 = vmatpush2.msra.mxu0 0.0
    %2215 = vmatprep.subr.mxu0 0.0
    %2216 = vmatpush2.msra.mxu0 0.0
    %2217 = vmatprep.subr.mxu0 0.0
    %2218 = vmatpush2.msra.mxu0 0.0
    %2219 = vmatprep.subr.mxu0 0.0
    %2220 = vmatpush2.msra.mxu0 0.0
    %2221 = vmatprep.subr.mxu0 0.0
    %2222 = vmatpush2.msra.mxu0 0.0
    %2223 = vmatprep.subr.mxu0 0.0
    %2224 = vmatpush2.msra.mxu0 0.0
    %2225 = vmatprep.mubr.f32.mxu0 0.0
    %2226 = vmatmul.mubr.f32.gmra.mxu0 %v2159
    %v2227 = vpop.f32.mrf.mxu0
    %v2228 = vadd.f32 %v2157, %v2227
    %v2229 = vpop.f32.mrf.mxu0
    %2230 = vdwg.mxu0
    %v2231 = vadd.f32 %v2061, %v2228
    %v2232 = vld [vmem:[#allocation6 + $0x1c8] sm:$0x1]
    %v2233 = vld [vmem:[#allocation6 + $0x1d0] sm:$0x1]
    %v2234 = vsel %vm129, %v2231, 0.0
    %2235 = vadd.xlane.f32.xlu0 %v2234
    %v2236 = vpop.xlane.xlu0 %2235
    %v2237 = vmul.f32 %v2236, %v975
    %v2238 = vsub.f32 %v2231, %v2237
    %v2239 = vmul.f32 %v2238, %v2238
    %v2240 = vsel %vm129, %v2239, 0.0
    %2241 = vadd.xlane.f32.xlu0 %v2240
    %v2242 = vpop.xlane.xlu0 %2241
    %v2243 = vmul.f32 %v2242, %v975
    %v2244 = vadd.f32 %v2243, 1e-05
    %v2245 = vrsqrt.pop %v2244
    %v2246 = vmul.f32 %v2238, %v2245
    %v2247 = vlaneseq
    %v2248 = vshrl.u32 %v2247, 7
    %v2249 = vsub.s32 0, %v2248
    %v2250 = vrot.slane %v2232, %v2249
    %v2251 = vmul.f32 %v2246, %v2250
    %v2252 = vlaneseq
    %v2253 = vshrl.u32 %v2252, 7
    %v2254 = vsub.s32 0, %v2253
    %v2255 = vrot.slane %v2233, %v2254
    %v2256 = vadd.f32 %v2251, %v2255
    %v2257 = vld [vmem:[#allocation6 + $0x1d8] sm:$0x1]
    %v2258 = vld [vmem:[#allocation6 + $0x1e0] sm:$0x1]
    %2260 = vset.pattern.permute.xlu0 0
    %2261 = vperm.xlu0 %2260, %v2258
    %v2262 = vpop.permute.xlu0 %2261
    %v2265 = vsel %vm129, %v2257, 0
    %v2268 = vsel %vm129, %v2256, 0
    %2270 = vmatprep.subr.mxu0 0.0
    %2271 = vmatpush1.xpose.msra.mxu0 0.0
    %2272 = vmatprep.subr.mxu0 0.0
    %2273 = vmatpush1.xpose.msra.mxu0 0.0
    %2274 = vmatprep.subr.mxu0 0.0
    %2275 = vmatpush1.xpose.msra.mxu0 0.0
    %2276 = vmatprep.subr.mxu0 0.0
    %2277 = vmatpush1.xpose.msra.mxu0 0.0
    %2278 = vmatprep.subr.mxu0 0.0
    %2279 = vmatpush1.xpose.msra.mxu0 0.0
    %2280 = vmatprep.subr.mxu0 0.0
    %2281 = vmatpush1.xpose.msra.mxu0 0.0
    %2282 = vmatprep.subr.mxu0 0.0
    %2283 = vmatpush1.xpose.msra.mxu0 0.0
    %2284 = vmatprep.subr.mxu0 0.0
    %2285 = vmatpush1.xpose.msra.mxu0 0.0
    %2286 = vmatprep.subr.mxu0 0.0
    %2287 = vmatpush1.xpose.msra.mxu0 0.0
    %2288 = vmatprep.subr.mxu0 0.0
    %2289 = vmatpush1.xpose.msra.mxu0 0.0
    %2290 = vmatprep.subr.mxu0 0.0
    %2291 = vmatpush1.xpose.msra.mxu0 0.0
    %2292 = vmatprep.subr.mxu0 0.0
    %2293 = vmatpush1.xpose.msra.mxu0 0.0
    %2294 = vmatprep.subr.mxu0 0.0
    %2295 = vmatpush1.xpose.msra.mxu0 0.0
    %2296 = vmatprep.subr.mxu0 0.0
    %2297 = vmatpush1.xpose.msra.mxu0 0.0
    %2298 = vmatprep.subr.mxu0 0.0
    %2299 = vmatpush1.xpose.msra.mxu0 0.0
    %2300 = vmatprep.subr.mxu0 0.0
    %2301 = vmatpush1.xpose.msra.mxu0 %v2268
    %2302 = vmatprep.subr.mxu0 0.0
    %2303 = vmatpush2.xpose.msra.mxu0 0.0
    %2304 = vmatprep.subr.mxu0 0.0
    %2305 = vmatpush2.xpose.msra.mxu0 0.0
    %2306 = vmatprep.subr.mxu0 0.0
    %2307 = vmatpush2.xpose.msra.mxu0 0.0
    %2308 = vmatprep.subr.mxu0 0.0
    %2309 = vmatpush2.xpose.msra.mxu0 0.0
    %2310 = vmatprep.subr.mxu0 0.0
    %2311 = vmatpush2.xpose.msra.mxu0 0.0
    %2312 = vmatprep.subr.mxu0 0.0
    %2313 = vmatpush2.xpose.msra.mxu0 0.0
    %2314 = vmatprep.subr.mxu0 0.0
    %2315 = vmatpush2.xpose.msra.mxu0 0.0
    %2316 = vmatprep.subr.mxu0 0.0
    %2317 = vmatpush2.xpose.msra.mxu0 0.0
    %2318 = vmatprep.subr.mxu0 0.0
    %2319 = vmatpush2.xpose.msra.mxu0 0.0
    %2320 = vmatprep.subr.mxu0 0.0
    %2321 = vmatpush2.xpose.msra.mxu0 0.0
    %2322 = vmatprep.subr.mxu0 0.0
    %2323 = vmatpush2.xpose.msra.mxu0 0.0
    %2324 = vmatprep.subr.mxu0 0.0
    %2325 = vmatpush2.xpose.msra.mxu0 0.0
    %2326 = vmatprep.subr.mxu0 0.0
    %2327 = vmatpush2.xpose.msra.mxu0 0.0
    %2328 = vmatprep.subr.mxu0 0.0
    %2329 = vmatpush2.xpose.msra.mxu0 0.0
    %2330 = vmatprep.subr.mxu0 0.0
    %2331 = vmatpush2.xpose.msra.mxu0 0.0
    %2332 = vmatprep.subr.mxu0 0.0
    %2333 = vmatpush2.xpose.msra.mxu0 0.0
    %2334 = vmatprep.mubr.f32.mxu0 0.0
    %2335 = vmatmul.mubr.f32.gmra.mxu0 %v2265
    %v2336 = vpop.f32.mrf.mxu0
    %v2337 = vadd.f32 %v2262, %v2336
    %v2338 = vpop.f32.mrf.mxu0
    %2339 = vdwg.mxu0
    %vm2340 = vcmask 57344
    %2341 = vst.msk [vmem:[#allocation8] sm:$0x1] %vm2340, %v2337
    // Predicated region
    $region18: #{tpu_custom_call.1} parent=1 // pred_check
      _
    $region19: #{tpu_custom_call.1} parent=1 // pred_check_branch
      %2343 = sbr.rel (0) target = $region21
    $region20: #{tpu_custom_call.1} parent=1 // pred_region
      %s2345 = ssub.s32 16, 16
      %2346 = vsyncadd [#allocation5], %s2345
      %s2348 = sshll.u32 [#allocation8], 4
      %s2349 = int_to_ptr.vmem [resolvable:$true] %s2348
      %2351 = dma.vmem_to_hbm [thread:$0]  %s2349, 16, %s2, [#allocation5]
    $region21: #{tpu_custom_call.1} parent=1 // pred_fallthru
      _
    // Predicated region
    $region22: #{tpu_custom_call.1} parent=1 // pred_check
      _
    $region23: #{tpu_custom_call.1} parent=1 // pred_check_branch
      %2353 = sbr.rel (0) target = $region25
    $region24: #{tpu_custom_call.1} parent=1 // pred_region
      %2354 = dma.done [#allocation5], 16
    $region25: #{tpu_custom_call.1} parent=1 // pred_fallthru
      _
    %2355 = vsyncpa [#allocation4], 1
    %2356 = vsyncpa [#allocation7], 1
    %2357 = vsyncpa [#allocation5], 1

</llo_original>
